<compile_context>
chip_gen: v6e
topology: v6e:2x2x1
jax: 0.10.0
libtpu: 0.0.40
codegen_flags: <defaults>
</compile_context>

<pallas_src>
import math

import jax
import jax.numpy as jnp
from jax.experimental import pallas as pl
from jax.experimental.pallas import tpu as pltpu

CLS_PAD = 128      # classifier logits padded to a lane-dense width
NEG_INF = -1e30    # bias for padded classifier columns -> softmax prob exactly 0


# -----------------------------------------------------------------------------
# Shared per-row-tile DGM forward + ELBO terms (runs inside the fused kernels).
# Matmul operands bf16, accumulation + elementwise math f32.
# -----------------------------------------------------------------------------
def _dgm_elbo_rows(x_f32, eps, hx, enc_y, enc_b, mu_w, mu_b, lv_w, lv_b,
                   dec_wz, dec_y, dec_b, out_w, out_b):
    h = jnp.maximum(hx + enc_y + enc_b, 0.0)                         # (tm, h)
    h_bf = h.astype(jnp.bfloat16)
    mu = jnp.dot(h_bf, mu_w, preferred_element_type=jnp.float32) + mu_b
    lv = jnp.dot(h_bf, lv_w, preferred_element_type=jnp.float32) + lv_b
    std = jnp.exp(0.5 * lv)
    z = mu + std * eps                                               # reparameterisation (in-kernel)
    hd = jnp.dot(z.astype(jnp.bfloat16), dec_wz,
                 preferred_element_type=jnp.float32) + dec_y + dec_b
    hd = jnp.maximum(hd, 0.0)
    logits = jnp.dot(hd.astype(jnp.bfloat16), out_w,
                     preferred_element_type=jnp.float32) + out_b
    recon = jax.nn.sigmoid(logits)                                   # (tm, x_dim)
    # binary_cross_entropy with PyTorch-style log clamp at -100
    log_r = jnp.maximum(jnp.log(recon), -100.0)
    log_1mr = jnp.maximum(jnp.log(1.0 - recon), -100.0)
    bce_row = -jnp.sum(x_f32 * log_r + (1.0 - x_f32) * log_1mr,
                       axis=-1, keepdims=True)                       # (tm, 1)
    kl_row = -0.5 * jnp.sum(1.0 + lv - mu * mu - std * std,
                            axis=-1, keepdims=True)                  # (tm, 1)
    return bce_row, kl_row


# -----------------------------------------------------------------------------
# Kernel 1a: unlabelled (label-enumerated) fused DGM + ELBO terms.
# grid = (row_tiles ["parallel"], y_dim ["arbitrary"]).
# x @ enc_Wx is computed once per row tile (label == 0) and reused from scratch.
# -----------------------------------------------------------------------------
def _svi_enum_kernel(x_ref, eps_ref, enc_wx_ref, enc_wy_ref, enc_b_ref,
                     mu_w_ref, mu_b_ref, lv_w_ref, lv_b_ref,
                     dec_wz_ref, dec_wy_ref, dec_b_ref,
                     out_w_ref, out_b_ref,
                     bce_ref, kl_ref, hx_ref):
    c = pl.program_id(1)
    x_f32 = x_ref[...]

    @pl.when(c == 0)
    def _():
        hx_ref[...] = jnp.dot(x_f32.astype(jnp.bfloat16), enc_wx_ref[...],
                              preferred_element_type=jnp.float32)

    bce_row, kl_row = _dgm_elbo_rows(
        x_f32, eps_ref[0], hx_ref[...],
        enc_wy_ref[0], enc_b_ref[...],
        mu_w_ref[...], mu_b_ref[...], lv_w_ref[...], lv_b_ref[...],
        dec_wz_ref[...], dec_wy_ref[0], dec_b_ref[...],
        out_w_ref[...], out_b_ref[...])
    bce_ref[0] = bce_row
    kl_ref[0] = kl_row


# -----------------------------------------------------------------------------
# Kernel 1b: labelled fused DGM + ELBO terms.  grid = (row_tiles ["parallel"],)
# -----------------------------------------------------------------------------
def _svi_lab_kernel(x_ref, y_ref, eps_ref, enc_wx_ref, enc_wy_ref, enc_b_ref,
                    mu_w_ref, mu_b_ref, lv_w_ref, lv_b_ref,
                    dec_wz_ref, dec_wy_ref, dec_b_ref,
                    out_w_ref, out_b_ref,
                    bce_ref, kl_ref):
    x_f32 = x_ref[...]
    y_bf = y_ref[...].astype(jnp.bfloat16)
    hx = jnp.dot(x_f32.astype(jnp.bfloat16), enc_wx_ref[...],
                 preferred_element_type=jnp.float32)
    enc_y = jnp.dot(y_bf, enc_wy_ref[...], preferred_element_type=jnp.float32)
    dec_y = jnp.dot(y_bf, dec_wy_ref[...], preferred_element_type=jnp.float32)
    bce_row, kl_row = _dgm_elbo_rows(
        x_f32, eps_ref[...], hx, enc_y, enc_b_ref[...],
        mu_w_ref[...], mu_b_ref[...], lv_w_ref[...], lv_b_ref[...],
        dec_wz_ref[...], dec_y, dec_b_ref[...],
        out_w_ref[...], out_b_ref[...])
    bce_ref[...] = bce_row
    kl_ref[...] = kl_row


# -----------------------------------------------------------------------------
# Kernel 2: fused classifier softmax + entropy + E_q[L] -> scalar U.
# Classifier width padded to 128 lanes (padded logits have -1e30 bias -> p = 0).
# -----------------------------------------------------------------------------
def _classify_u_kernel(x_ref, cls_w_ref, cls_b_ref, lmat_ref, u_ref):
    logits = jnp.dot(x_ref[...].astype(jnp.bfloat16), cls_w_ref[...],
                     preferred_element_type=jnp.float32) + cls_b_ref[...]
    p = jax.nn.softmax(logits, axis=-1)                              # (B, 128)
    ent = -jnp.sum(p * jnp.log(p + 1e-8), axis=-1, keepdims=True)    # H(q)
    lq = jnp.sum(p * lmat_ref[...], axis=-1, keepdims=True)          # E_q[L]
    u_ref[...] = jnp.mean(lq + ent, axis=(0, 1), keepdims=True)      # (1, 1)


# -----------------------------------------------------------------------------
# pallas_call wrappers
# -----------------------------------------------------------------------------
def _row_tile(b):
    """Row tile: multiple of 8, <=256, and >=2 grid steps when possible (v7x megacore)."""
    assert b % 8 == 0, "batch must be a multiple of 8"
    if b <= 8:
        return b
    tm = max(8, min(256, (b // 2) // 8 * 8))
    while b % tm:
        tm -= 8
    return tm


def _svi_enum_call(params, x, eps):
    b, x_dim = x.shape
    h_dim = params["enc_wx"].shape[1]
    z_dim = params["mu_w"].shape[1]
    y_dim = params["enc_wy"].shape[0]
    tm = _row_tile(b)
    grid = (b // tm, y_dim)

    def whole(shape):
        return pl.BlockSpec(shape, lambda i, c: (0,) * len(shape))

    enc_wy = params["enc_wy"].reshape(y_dim, 1, h_dim)
    dec_wy = params["dec_wy"].reshape(y_dim, 1, h_dim)

    # NOTE: constant-index weight blocks could use pipeline_mode=pl.Buffered(1)
    # to halve their VMEM at large h_dim/x_dim; irrelevant at these sizes.
    return pl.pallas_call(
        _svi_enum_kernel,
        out_shape=(jax.ShapeDtypeStruct((y_dim, b, 1), jnp.float32),
                   jax.ShapeDtypeStruct((y_dim, b, 1), jnp.float32)),
        grid=grid,
        in_specs=[
            pl.BlockSpec((tm, x_dim), lambda i, c: (i, 0)),        # x (reused across labels)
            pl.BlockSpec((1, tm, z_dim), lambda i, c: (c, i, 0)),  # eps per (label, row-tile)
            whole((x_dim, h_dim)),                                 # enc_Wx
            pl.BlockSpec((1, 1, h_dim), lambda i, c: (c, 0, 0)),   # enc_Wy[label]
            whole((1, h_dim)),                                     # enc_b
            whole((h_dim, z_dim)), whole((1, z_dim)),              # mu
            whole((h_dim, z_dim)), whole((1, z_dim)),              # logvar
            whole((z_dim, h_dim)),                                 # dec_Wz
            pl.BlockSpec((1, 1, h_dim), lambda i, c: (c, 0, 0)),   # dec_Wy[label]
            whole((1, h_dim)),                                     # dec_b
            whole((h_dim, x_dim)), whole((1, x_dim)),              # output layer
        ],
        out_specs=[
            pl.BlockSpec((1, tm, 1), lambda i, c: (c, i, 0)),      # per-row BCE sum
            pl.BlockSpec((1, tm, 1), lambda i, c: (c, i, 0)),      # per-row KL
        ],
        scratch_shapes=[pltpu.VMEM((tm, h_dim), jnp.float32)],     # x @ enc_Wx cache
        compiler_params=pltpu.CompilerParams(
            dimension_semantics=("parallel", "arbitrary")),
    )(x, eps,
      params["enc_wx"], enc_wy, params["enc_b"],
      params["mu_w"], params["mu_b"], params["lv_w"], params["lv_b"],
      params["dec_wz"], dec_wy, params["dec_b"],
      params["out_w"], params["out_b"])


def _svi_lab_call(params, x, y, eps):
    b, x_dim = x.shape
    h_dim = params["enc_wx"].shape[1]
    z_dim = params["mu_w"].shape[1]
    y_dim = params["enc_wy"].shape[0]
    tm = _row_tile(b)
    grid = (b // tm,)

    def whole(shape):
        return pl.BlockSpec(shape, lambda i: (0,) * len(shape))

    return pl.pallas_call(
        _svi_lab_kernel,
        out_shape=(jax.ShapeDtypeStruct((b, 1), jnp.float32),
                   jax.ShapeDtypeStruct((b, 1), jnp.float32)),
        grid=grid,
        in_specs=[
            pl.BlockSpec((tm, x_dim), lambda i: (i, 0)),
            pl.BlockSpec((tm, y_dim), lambda i: (i, 0)),
            pl.BlockSpec((tm, z_dim), lambda i: (i, 0)),
            whole((x_dim, h_dim)),
            whole((y_dim, h_dim)),
            whole((1, h_dim)),
            whole((h_dim, z_dim)), whole((1, z_dim)),
            whole((h_dim, z_dim)), whole((1, z_dim)),
            whole((z_dim, h_dim)),
            whole((y_dim, h_dim)),
            whole((1, h_dim)),
            whole((h_dim, x_dim)), whole((1, x_dim)),
        ],
        out_specs=[
            pl.BlockSpec((tm, 1), lambda i: (i, 0)),
            pl.BlockSpec((tm, 1), lambda i: (i, 0)),
        ],
        compiler_params=pltpu.CompilerParams(
            dimension_semantics=("parallel",)),
    )(x, y, eps,
      params["enc_wx"], params["enc_wy"], params["enc_b"],
      params["mu_w"], params["mu_b"], params["lv_w"], params["lv_b"],
      params["dec_wz"], params["dec_wy"], params["dec_b"],
      params["out_w"], params["out_b"])


def _classify_u_call(params, x, l_pad):
    return pl.pallas_call(
        _classify_u_kernel,
        out_shape=jax.ShapeDtypeStruct((1, 1), jnp.float32),
        in_specs=[pl.BlockSpec(memory_space=pltpu.MemorySpace.VMEM)] * 4,
        out_specs=pl.BlockSpec(memory_space=pltpu.MemorySpace.VMEM),
    )(x, params["cls_w"], params["cls_b"], l_pad)


# -----------------------------------------------------------------------------
# Stub DeepGenerativeModel parameters (weights split for lane-aligned matmuls).
# -----------------------------------------------------------------------------
def init_params(key, *, x_dim, y_dim, h_dim, z_dim):
    ks = jax.random.split(key, 8)

    def w(k, fi, fo):
        return (jax.random.normal(k, (fi, fo), jnp.float32)
                / jnp.sqrt(float(fi))).astype(jnp.bfloat16)

    cls_w = (jax.random.normal(ks[7], (x_dim, y_dim), jnp.float32)
             / jnp.sqrt(float(x_dim)))
    cls_w_pad = jnp.zeros((x_dim, CLS_PAD), jnp.float32).at[:, :y_dim].set(cls_w)
    cls_b_pad = jnp.full((1, CLS_PAD), NEG_INF, jnp.float32).at[0, :y_dim].set(0.0)

    return {
        "enc_wx": w(ks[0], x_dim, h_dim),
        "enc_wy": w(ks[1], y_dim, h_dim),
        "enc_b": jnp.zeros((1, h_dim), jnp.float32),
        "mu_w": w(ks[2], h_dim, z_dim), "mu_b": jnp.zeros((1, z_dim), jnp.float32),
        "lv_w": w(ks[3], h_dim, z_dim), "lv_b": jnp.zeros((1, z_dim), jnp.float32),
        "dec_wz": w(ks[4], z_dim, h_dim),
        "dec_wy": w(ks[5], y_dim, h_dim),
        "dec_b": jnp.zeros((1, h_dim), jnp.float32),
        "out_w": w(ks[6], h_dim, x_dim), "out_b": jnp.zeros((1, x_dim), jnp.float32),
        "cls_w": cls_w_pad.astype(jnp.bfloat16),   # lane-padded classifier
        "cls_b": cls_b_pad,
    }


# -----------------------------------------------------------------------------
# SVI.forward  (base ImportanceWeightedSampler(mc=1, iw=1) is the identity,
#               beta=repeat(1) -> beta=1.0; likelihood = BCE 'mean' reduction).
# -----------------------------------------------------------------------------
def svi_forward(params, x, y=None, *, y_dim, beta=1.0, rng=None):
    b, x_dim = x.shape
    z_dim = params["mu_w"].shape[1]
    log_prior = math.log(1.0 / y_dim + 1e-8)   # -log_standard_categorical for one-hot y
    if rng is None:
        rng = jax.random.PRNGKey(0)

    if y is not None:
        eps = jax.random.normal(rng, (b, z_dim), jnp.float32)
        bce_rows, kl_rows = _svi_lab_call(params, x, y, eps)          # (b,1) each
        likelihood = -jnp.sum(bce_rows) / (b * x_dim)                 # BCE mean over batch
        prior_term = log_prior * jnp.mean(jnp.sum(y, axis=-1))
        # mean_i [likelihood + prior - beta * kl_i]
        return likelihood + prior_term - beta * jnp.mean(kl_rows)

    # Unlabelled: labels enumerated as an inner grid axis (x never tiled y_dim x).
    eps = jax.random.normal(rng, (y_dim, b, z_dim), jnp.float32)
    bce_rows, kl_rows = _svi_enum_call(params, x, eps)                # (y_dim, b, 1)
    likelihood = -jnp.sum(bce_rows) / (y_dim * b * x_dim)             # BCE mean over enumerated batch
    # L.view_as(logits.t()).t()  ->  (b, y_dim)
    l_mat = (likelihood + log_prior) - beta * kl_rows[:, :, 0].T
    # TODO(synk): the tiny (y_dim, b) scalar assembly (sum / transpose / lane-pad)
    # is wrapper plumbing left to XLA.
    l_pad = jnp.zeros((b, CLS_PAD), jnp.float32).at[:, :y_dim].set(l_mat)
    u = _classify_u_call(params, x, l_pad)                            # (1, 1)
    return u[0, 0]


if __name__ == "__main__":
    key = jax.random.PRNGKey(0)
    k_x, k_p, k_eps, k_lbl = jax.random.split(key, 4)

    batch, x_dim, y_dim, h_dim, z_dim = 16, 256, 4, 128, 128

    # Bernoulli-style inputs in [0, 1] (targets of binary_cross_entropy).
    x = jax.random.uniform(k_x, (batch, x_dim), dtype=jnp.float32)
    params = init_params(k_p, x_dim=x_dim, y_dim=y_dim, h_dim=h_dim, z_dim=z_dim)

    # Unlabelled path (y=None): U objective over enumerated labels.
    u = svi_forward(params, x, y=None, y_dim=y_dim, beta=1.0, rng=k_eps)
    u = jax.block_until_ready(u)

    # Labelled path: mean ELBO with given one-hot labels.
    labels = jax.random.randint(k_lbl, (batch,), 0, y_dim)
    y_onehot = jax.nn.one_hot(labels, y_dim, dtype=jnp.float32)
    l_lab = svi_forward(params, x, y=y_onehot, y_dim=y_dim, beta=1.0, rng=k_eps)
    l_lab = jax.block_until_ready(l_lab)

    assert u.shape == () and bool(jnp.isfinite(u)), f"bad unlabelled objective {u}"
    assert l_lab.shape == () and bool(jnp.isfinite(l_lab)), f"bad labelled objective {l_lab}"

    print("KERNEL_OK")
</pallas_src>

<mosaic_0001>
module attributes {stable_mosaic.version = 11 : i64} {
  func.func @_svi_enum_kernel(%arg0: i32, %arg1: i32, %arg2: memref<8x256xf32, #tpu.memory_space<vmem>>, %arg3: memref<1x8x128xf32, #tpu.memory_space<vmem>>, %arg4: memref<256x128xbf16, #tpu.memory_space<vmem>>, %arg5: memref<1x1x128xbf16, #tpu.memory_space<vmem>>, %arg6: memref<1x128xf32, #tpu.memory_space<vmem>>, %arg7: memref<128x128xbf16, #tpu.memory_space<vmem>>, %arg8: memref<1x128xf32, #tpu.memory_space<vmem>>, %arg9: memref<128x128xbf16, #tpu.memory_space<vmem>>, %arg10: memref<1x128xf32, #tpu.memory_space<vmem>>, %arg11: memref<128x128xbf16, #tpu.memory_space<vmem>>, %arg12: memref<1x1x128xbf16, #tpu.memory_space<vmem>>, %arg13: memref<1x128xf32, #tpu.memory_space<vmem>>, %arg14: memref<128x256xbf16, #tpu.memory_space<vmem>>, %arg15: memref<1x256xf32, #tpu.memory_space<vmem>>, %arg16: memref<1x8x1xf32, #tpu.memory_space<vmem>>, %arg17: memref<1x8x1xf32, #tpu.memory_space<vmem>>, %arg18: memref<8x128xf32, #tpu.memory_space<vmem>>) attributes {dimension_semantics = [#tpu.dimension_semantics<parallel>, #tpu.dimension_semantics<arbitrary>], iteration_bounds = array<i64: 2, 4>, scalar_prefetch = 0 : i64, scratch_operands = 1 : i64, tpu.core_type = #tpu.core_type<tc>, window_params = [{transform_indices = @transform_0, window_bounds = array<i64: 8, 256>}, {transform_indices = @transform_1, window_bounds = array<i64: 1, 8, 128>}, {pipeline_mode = #tpu.pipeline_mode<synchronous>, transform_indices = @transform_2, window_bounds = array<i64: 256, 128>}, {transform_indices = @transform_3, window_bounds = array<i64: 1, 1, 128>}, {pipeline_mode = #tpu.pipeline_mode<synchronous>, transform_indices = @transform_4, window_bounds = array<i64: 1, 128>}, {pipeline_mode = #tpu.pipeline_mode<synchronous>, transform_indices = @transform_5, window_bounds = array<i64: 128, 128>}, {pipeline_mode = #tpu.pipeline_mode<synchronous>, transform_indices = @transform_6, window_bounds = array<i64: 1, 128>}, {pipeline_mode = #tpu.pipeline_mode<synchronous>, transform_indices = @transform_7, window_bounds = array<i64: 128, 128>}, {pipeline_mode = #tpu.pipeline_mode<synchronous>, transform_indices = @transform_8, window_bounds = array<i64: 1, 128>}, {pipeline_mode = #tpu.pipeline_mode<synchronous>, transform_indices = @transform_9, window_bounds = array<i64: 128, 128>}, {transform_indices = @transform_10, window_bounds = array<i64: 1, 1, 128>}, {pipeline_mode = #tpu.pipeline_mode<synchronous>, transform_indices = @transform_11, window_bounds = array<i64: 1, 128>}, {pipeline_mode = #tpu.pipeline_mode<synchronous>, transform_indices = @transform_12, window_bounds = array<i64: 128, 256>}, {pipeline_mode = #tpu.pipeline_mode<synchronous>, transform_indices = @transform_13, window_bounds = array<i64: 1, 256>}, {transform_indices = @transform_14, window_bounds = array<i64: 1, 8, 1>}, {transform_indices = @transform_15, window_bounds = array<i64: 1, 8, 1>}]} {
    %c0 = arith.constant 0 : index
    %c0_0 = arith.constant 0 : index
    %0 = vector.load %arg2[%c0, %c0_0] : memref<8x256xf32, #tpu.memory_space<vmem>>, vector<8x256xf32>
    %c0_i32 = arith.constant 0 : i32
    %1 = arith.cmpi eq, %arg1, %c0_i32 : i32
    %2 = arith.extui %1 : i1 to i32
    %c0_i32_1 = arith.constant 0 : i32
    %3 = arith.cmpi ne, %2, %c0_i32_1 : i32
    scf.if %3 {
      %90 = arith.truncf %0 : vector<8x256xf32> to vector<8x256xbf16>
      %c0_53 = arith.constant 0 : index
      %c0_54 = arith.constant 0 : index
      %91 = vector.load %arg4[%c0_53, %c0_54] : memref<256x128xbf16, #tpu.memory_space<vmem>>, vector<256x128xbf16>
      %cst_55 = arith.constant dense<0.000000e+00> : vector<8x128xf32>
      %92 = tpu.matmul %90, %91, %cst_55 {dimension_numbers = #tpu.dot_dimension_numbers<[1], [0], [0], [1], [0, 0, 1, 1], [], []>} : vector<8x256xbf16>, vector<256x128xbf16>, vector<8x128xf32> -> vector<8x128xf32>
      %c0_56 = arith.constant 0 : index
      %c0_57 = arith.constant 0 : index
      %93 = vector.load %arg18[%c0_56, %c0_57] : memref<8x128xf32, #tpu.memory_space<vmem>>, vector<8x128xf32>
      tpu.vector_store %arg18[%c0_56, %c0_57], %92 {strides = array<i32>} : memref<8x128xf32, #tpu.memory_space<vmem>>, vector<8x128xf32>,
    } else {
    }
    %c0_2 = arith.constant 0 : index
    %c0_3 = arith.constant 0 : index
    %c0_4 = arith.constant 0 : index
    %4 = vector.load %arg3[%c0_2, %c0_3, %c0_4] : memref<1x8x128xf32, #tpu.memory_space<vmem>>, vector<1x8x128xf32>
    %5 = vector.shape_cast %4 : vector<1x8x128xf32> to vector<8x128xf32>
    %c0_5 = arith.constant 0 : index
    %c0_6 = arith.constant 0 : index
    %6 = vector.load %arg18[%c0_5, %c0_6] : memref<8x128xf32, #tpu.memory_space<vmem>>, vector<8x128xf32>
    %c0_7 = arith.constant 0 : index
    %c0_8 = arith.constant 0 : index
    %c0_9 = arith.constant 0 : index
    %7 = vector.load %arg5[%c0_7, %c0_8, %c0_9] : memref<1x1x128xbf16, #tpu.memory_space<vmem>>, vector<1x1x128xbf16>
    %8 = vector.shape_cast %7 : vector<1x1x128xbf16> to vector<1x128xbf16>
    %c0_10 = arith.constant 0 : index
    %c0_11 = arith.constant 0 : index
    %9 = vector.load %arg6[%c0_10, %c0_11] : memref<1x128xf32, #tpu.memory_space<vmem>>, vector<1x128xf32>
    %c0_12 = arith.constant 0 : index
    %c0_13 = arith.constant 0 : index
    %10 = vector.load %arg7[%c0_12, %c0_13] : memref<128x128xbf16, #tpu.memory_space<vmem>>, vector<128x128xbf16>
    %c0_14 = arith.constant 0 : index
    %c0_15 = arith.constant 0 : index
    %11 = vector.load %arg8[%c0_14, %c0_15] : memref<1x128xf32, #tpu.memory_space<vmem>>, vector<1x128xf32>
    %c0_16 = arith.constant 0 : index
    %c0_17 = arith.constant 0 : index
    %12 = vector.load %arg9[%c0_16, %c0_17] : memref<128x128xbf16, #tpu.memory_space<vmem>>, vector<128x128xbf16>
    %c0_18 = arith.constant 0 : index
    %c0_19 = arith.constant 0 : index
    %13 = vector.load %arg10[%c0_18, %c0_19] : memref<1x128xf32, #tpu.memory_space<vmem>>, vector<1x128xf32>
    %c0_20 = arith.constant 0 : index
    %c0_21 = arith.constant 0 : index
    %14 = vector.load %arg11[%c0_20, %c0_21] : memref<128x128xbf16, #tpu.memory_space<vmem>>, vector<128x128xbf16>
    %c0_22 = arith.constant 0 : index
    %c0_23 = arith.constant 0 : index
    %c0_24 = arith.constant 0 : index
    %15 = vector.load %arg12[%c0_22, %c0_23, %c0_24] : memref<1x1x128xbf16, #tpu.memory_space<vmem>>, vector<1x1x128xbf16>
    %16 = vector.shape_cast %15 : vector<1x1x128xbf16> to vector<1x128xbf16>
    %c0_25 = arith.constant 0 : index
    %c0_26 = arith.constant 0 : index
    %17 = vector.load %arg13[%c0_25, %c0_26] : memref<1x128xf32, #tpu.memory_space<vmem>>, vector<1x128xf32>
    %c0_27 = arith.constant 0 : index
    %c0_28 = arith.constant 0 : index
    %18 = vector.load %arg14[%c0_27, %c0_28] : memref<128x256xbf16, #tpu.memory_space<vmem>>, vector<128x256xbf16>
    %c0_29 = arith.constant 0 : index
    %c0_30 = arith.constant 0 : index
    %19 = vector.load %arg15[%c0_29, %c0_30] : memref<1x256xf32, #tpu.memory_space<vmem>>, vector<1x256xf32>
    %20 = arith.extf %8 : vector<1x128xbf16> to vector<1x128xf32>
    %21 = vector.broadcast %20 : vector<1x128xf32> to vector<8x128xf32>
    %22 = arith.addf %6, %21 : vector<8x128xf32>
    %23 = vector.broadcast %9 : vector<1x128xf32> to vector<8x128xf32>
    %24 = arith.addf %22, %23 : vector<8x128xf32>
    %cst = arith.constant 0.000000e+00 : f32
    %25 = vector.broadcast %cst : f32 to vector<8x128xf32>
    %26 = arith.maximumf %24, %25 : vector<8x128xf32>
    %27 = arith.truncf %26 : vector<8x128xf32> to vector<8x128xbf16>
    %cst_31 = arith.constant dense<0.000000e+00> : vector<8x128xf32>
    %28 = tpu.matmul %27, %10, %cst_31 {dimension_numbers = #tpu.dot_dimension_numbers<[1], [0], [0], [1], [0, 0, 1, 1], [], []>} : vector<8x128xbf16>, vector<128x128xbf16>, vector<8x128xf32> -> vector<8x128xf32>
    %29 = vector.broadcast %11 : vector<1x128xf32> to vector<8x128xf32>
    %30 = arith.addf %28, %29 : vector<8x128xf32>
    %cst_32 = arith.constant dense<0.000000e+00> : vector<8x128xf32>
    %31 = tpu.matmul %27, %12, %cst_32 {dimension_numbers = #tpu.dot_dimension_numbers<[1], [0], [0], [1], [0, 0, 1, 1], [], []>} : vector<8x128xbf16>, vector<128x128xbf16>, vector<8x128xf32> -> vector<8x128xf32>
    %32 = vector.broadcast %13 : vector<1x128xf32> to vector<8x128xf32>
    %33 = arith.addf %31, %32 : vector<8x128xf32>
    %cst_33 = arith.constant 5.000000e-01 : f32
    %34 = vector.broadcast %cst_33 : f32 to vector<8x128xf32>
    %35 = arith.mulf %34, %33 : vector<8x128xf32>
    %36 = math.exp %35 : vector<8x128xf32>
    %37 = arith.mulf %36, %5 : vector<8x128xf32>
    %38 = arith.addf %30, %37 : vector<8x128xf32>
    %39 = arith.truncf %38 : vector<8x128xf32> to vector<8x128xbf16>
    %cst_34 = arith.constant dense<0.000000e+00> : vector<8x128xf32>
    %40 = tpu.matmul %39, %14, %cst_34 {dimension_numbers = #tpu.dot_dimension_numbers<[1], [0], [0], [1], [0, 0, 1, 1], [], []>} : vector<8x128xbf16>, vector<128x128xbf16>, vector<8x128xf32> -> vector<8x128xf32>
    %41 = arith.extf %16 : vector<1x128xbf16> to vector<1x128xf32>
    %42 = vector.broadcast %41 : vector<1x128xf32> to vector<8x128xf32>
    %43 = arith.addf %40, %42 : vector<8x128xf32>
    %44 = vector.broadcast %17 : vector<1x128xf32> to vector<8x128xf32>
    %45 = arith.addf %43, %44 : vector<8x128xf32>
    %cst_35 = arith.constant 0.000000e+00 : f32
    %46 = vector.broadcast %cst_35 : f32 to vector<8x128xf32>
    %47 = arith.maximumf %45, %46 : vector<8x128xf32>
    %48 = arith.truncf %47 : vector<8x128xf32> to vector<8x128xbf16>
    %cst_36 = arith.constant dense<0.000000e+00> : vector<8x256xf32>
    %49 = tpu.matmul %48, %18, %cst_36 {dimension_numbers = #tpu.dot_dimension_numbers<[1], [0], [0], [1], [0, 0, 1, 1], [], []>} : vector<8x128xbf16>, vector<128x256xbf16>, vector<8x256xf32> -> vector<8x256xf32>
    %50 = vector.broadcast %19 : vector<1x256xf32> to vector<8x256xf32>
    %51 = arith.addf %49, %50 : vector<8x256xf32>
    %52 = arith.negf %51 : vector<8x256xf32>
    %53 = math.exp %52 : vector<8x256xf32>
    %cst_37 = arith.constant 1.000000e+00 : f32
    %54 = vector.broadcast %cst_37 : f32 to vector<8x256xf32>
    %55 = arith.addf %54, %53 : vector<8x256xf32>
    %56 = arith.divf %54, %55 : vector<8x256xf32>
    %57 = math.log %56 : vector<8x256xf32>
    %cst_38 = arith.constant -1.000000e+02 : f32
    %58 = vector.broadcast %cst_38 : f32 to vector<8x256xf32>
    %59 = arith.maximumf %57, %58 : vector<8x256xf32>
    %cst_39 = arith.constant 1.000000e+00 : f32
    %60 = vector.broadcast %cst_39 : f32 to vector<8x256xf32>
    %61 = arith.subf %60, %56 : vector<8x256xf32>
    %62 = math.log %61 : vector<8x256xf32>
    %cst_40 = arith.constant -1.000000e+02 : f32
    %63 = vector.broadcast %cst_40 : f32 to vector<8x256xf32>
    %64 = arith.maximumf %62, %63 : vector<8x256xf32>
    %65 = arith.mulf %0, %59 : vector<8x256xf32>
    %cst_41 = arith.constant 1.000000e+00 : f32
    %66 = vector.broadcast %cst_41 : f32 to vector<8x256xf32>
    %67 = arith.subf %66, %0 : vector<8x256xf32>
    %68 = arith.mulf %67, %64 : vector<8x256xf32>
    %69 = arith.addf %65, %68 : vector<8x256xf32>
    %cst_42 = arith.constant dense<0.000000e+00> : vector<8xf32>
    %70 = vector.multi_reduction <add>, %69, %cst_42 [1] : vector<8x256xf32> to vector<8xf32>
    %71 = vector.shape_cast %70 : vector<8xf32> to vector<8x1xf32>
    %cst_43 = arith.constant 0.000000e+00 : f32
    %72 = vector.broadcast %cst_43 : f32 to vector<8x1xf32>
    %73 = arith.subf %72, %71 : vector<8x1xf32>
    %cst_44 = arith.constant 1.000000e+00 : f32
    %74 = vector.broadcast %cst_44 : f32 to vector<8x128xf32>
    %75 = arith.addf %74, %33 : vector<8x128xf32>
    %76 = arith.mulf %30, %30 : vector<8x128xf32>
    %77 = arith.subf %75, %76 : vector<8x128xf32>
    %78 = arith.mulf %36, %36 : vector<8x128xf32>
    %79 = arith.subf %77, %78 : vector<8x128xf32>
    %cst_45 = arith.constant dense<0.000000e+00> : vector<8xf32>
    %80 = vector.multi_reduction <add>, %79, %cst_45 [1] : vector<8x128xf32> to vector<8xf32>
    %81 = vector.shape_cast %80 : vector<8xf32> to vector<8x1xf32>
    %cst_46 = arith.constant -5.000000e-01 : f32
    %82 = vector.broadcast %cst_46 : f32 to vector<8x1xf32>
    %83 = arith.mulf %82, %81 : vector<8x1xf32>
    %c0_47 = arith.constant 0 : index
    %c0_48 = arith.constant 0 : index
    %c0_49 = arith.constant 0 : index
    %84 = vector.load %arg16[%c0_47, %c0_48, %c0_49] : memref<1x8x1xf32, #tpu.memory_space<vmem>>, vector<1x8x1xf32>
    %85 = vector.shape_cast %84 : vector<1x8x1xf32> to vector<8x1xf32>
    %86 = vector.shape_cast %73 : vector<8x1xf32> to vector<1x8x1xf32>
    tpu.vector_store %arg16[%c0_47, %c0_48, %c0_49], %86 {strides = array<i32>} : memref<1x8x1xf32, #tpu.memory_space<vmem>>, vector<1x8x1xf32>,
    %c0_50 = arith.constant 0 : index
    %c0_51 = arith.constant 0 : index
    %c0_52 = arith.constant 0 : index
    %87 = vector.load %arg17[%c0_50, %c0_51, %c0_52] : memref<1x8x1xf32, #tpu.memory_space<vmem>>, vector<1x8x1xf32>
    %88 = vector.shape_cast %87 : vector<1x8x1xf32> to vector<8x1xf32>
    %89 = vector.shape_cast %83 : vector<8x1xf32> to vector<1x8x1xf32>
    tpu.vector_store %arg17[%c0_50, %c0_51, %c0_52], %89 {strides = array<i32>} : memref<1x8x1xf32, #tpu.memory_space<vmem>>, vector<1x8x1xf32>,
    return
  }
  func.func @transform_0(%arg0: i32, %arg1: i32) -> (i32, i32) {
    %c0_i32 = arith.constant 0 : i32
    %c0_i32_0 = arith.constant 0 : i32
    return %arg0, %c0_i32 : i32, i32
  }
  func.func @transform_1(%arg0: i32, %arg1: i32) -> (i32, i32, i32) {
    %c0_i32 = arith.constant 0 : i32
    %c0_i32_0 = arith.constant 0 : i32
    return %arg1, %arg0, %c0_i32 : i32, i32, i32
  }
  func.func @transform_2(%arg0: i32, %arg1: i32) -> (i32, i32) {
    %c0_i32 = arith.constant 0 : i32
    %c0_i32_0 = arith.constant 0 : i32
    %c0_i32_1 = arith.constant 0 : i32
    return %c0_i32, %c0_i32_0 : i32, i32
  }
  func.func @transform_3(%arg0: i32, %arg1: i32) -> (i32, i32, i32) {
    %c0_i32 = arith.constant 0 : i32
    %c0_i32_0 = arith.constant 0 : i32
    %c0_i32_1 = arith.constant 0 : i32
    return %arg1, %c0_i32, %c0_i32_0 : i32, i32, i32
  }
  func.func @transform_4(%arg0: i32, %arg1: i32) -> (i32, i32) {
    %c0_i32 = arith.constant 0 : i32
    %c0_i32_0 = arith.constant 0 : i32
    %c0_i32_1 = arith.constant 0 : i32
    return %c0_i32, %c0_i32_0 : i32, i32
  }
  func.func @transform_5(%arg0: i32, %arg1: i32) -> (i32, i32) {
    %c0_i32 = arith.constant 0 : i32
    %c0_i32_0 = arith.constant 0 : i32
    %c0_i32_1 = arith.constant 0 : i32
    return %c0_i32, %c0_i32_0 : i32, i32
  }
  func.func @transform_6(%arg0: i32, %arg1: i32) -> (i32, i32) {
    %c0_i32 = arith.constant 0 : i32
    %c0_i32_0 = arith.constant 0 : i32
    %c0_i32_1 = arith.constant 0 : i32
    return %c0_i32, %c0_i32_0 : i32, i32
  }
  func.func @transform_7(%arg0: i32, %arg1: i32) -> (i32, i32) {
    %c0_i32 = arith.constant 0 : i32
    %c0_i32_0 = arith.constant 0 : i32
    %c0_i32_1 = arith.constant 0 : i32
    return %c0_i32, %c0_i32_0 : i32, i32
  }
  func.func @transform_8(%arg0: i32, %arg1: i32) -> (i32, i32) {
    %c0_i32 = arith.constant 0 : i32
    %c0_i32_0 = arith.constant 0 : i32
    %c0_i32_1 = arith.constant 0 : i32
    return %c0_i32, %c0_i32_0 : i32, i32
  }
  func.func @transform_9(%arg0: i32, %arg1: i32) -> (i32, i32) {
    %c0_i32 = arith.constant 0 : i32
    %c0_i32_0 = arith.constant 0 : i32
    %c0_i32_1 = arith.constant 0 : i32
    return %c0_i32, %c0_i32_0 : i32, i32
  }
  func.func @transform_10(%arg0: i32, %arg1: i32) -> (i32, i32, i32) {
    %c0_i32 = arith.constant 0 : i32
    %c0_i32_0 = arith.constant 0 : i32
    %c0_i32_1 = arith.constant 0 : i32
    return %arg1, %c0_i32, %c0_i32_0 : i32, i32, i32
  }
  func.func @transform_11(%arg0: i32, %arg1: i32) -> (i32, i32) {
    %c0_i32 = arith.constant 0 : i32
    %c0_i32_0 = arith.constant 0 : i32
    %c0_i32_1 = arith.constant 0 : i32
    return %c0_i32, %c0_i32_0 : i32, i32
  }
  func.func @transform_12(%arg0: i32, %arg1: i32) -> (i32, i32) {
    %c0_i32 = arith.constant 0 : i32
    %c0_i32_0 = arith.constant 0 : i32
    %c0_i32_1 = arith.constant 0 : i32
    return %c0_i32, %c0_i32_0 : i32, i32
  }
  func.func @transform_13(%arg0: i32, %arg1: i32) -> (i32, i32) {
    %c0_i32 = arith.constant 0 : i32
    %c0_i32_0 = arith.constant 0 : i32
    %c0_i32_1 = arith.constant 0 : i32
    return %c0_i32, %c0_i32_0 : i32, i32
  }
  func.func @transform_14(%arg0: i32, %arg1: i32) -> (i32, i32, i32) {
    %c0_i32 = arith.constant 0 : i32
    %c0_i32_0 = arith.constant 0 : i32
    return %arg1, %arg0, %c0_i32 : i32, i32, i32
  }
  func.func @transform_15(%arg0: i32, %arg1: i32) -> (i32, i32, i32) {
    %c0_i32 = arith.constant 0 : i32
    %c0_i32_0 = arith.constant 0 : i32
    return %arg1, %arg0, %c0_i32 : i32, i32, i32
  }
}

</mosaic_0001>

<llo_original>
// kernel: tpu_custom_call.1
$region0: #{tpu_custom_call.1}
  #allocation0 [shape = 'u32[]', space=smem, size = 0x4, offset = 0x4, fixed_abs, tag = 'smem constant byte address 0x4 - core index']
  #allocation1 [shape = 'u32[144,128]{1,0:T(1,128)}', space=vmem, size = 0x12000, scoped, tag = 'internal scratch']
  #allocation2 [shape = 'f32[8,128]{1,0:T(8,128)}', space=vmem, size = 0x1000, scoped, tag = 'scratch operand']
  %s0 = inlined_call_operand.hbm [shape: f32[16,256], index: 0, kind: input, shape index: {}]
  %s1 = inlined_call_operand.hbm [shape: f32[4,16,128], index: 1, kind: input, shape index: {}]
  %s2 = inlined_call_operand.hbm [shape: bf16[256,128], index: 2, kind: input, shape index: {}]
  %s3 = inlined_call_operand.vmem [shape: bf16[4,1,128], index: 3, kind: input, shape index: {}]
  %s4 = inlined_call_operand.vmem [shape: f32[1,128], index: 4, kind: input, shape index: {}]
  %s5 = inlined_call_operand.hbm [shape: bf16[128,128], index: 5, kind: input, shape index: {}]
  %s6 = inlined_call_operand.vmem [shape: f32[1,128], index: 6, kind: input, shape index: {}]
  %s7 = inlined_call_operand.hbm [shape: bf16[128,128], index: 7, kind: input, shape index: {}]
  %s8 = inlined_call_operand.vmem [shape: f32[1,128], index: 8, kind: input, shape index: {}]
  %s9 = inlined_call_operand.hbm [shape: bf16[128,128], index: 9, kind: input, shape index: {}]
  %s10 = inlined_call_operand.vmem [shape: bf16[4,1,128], index: 10, kind: input, shape index: {}]
  %s11 = inlined_call_operand.vmem [shape: f32[1,128], index: 11, kind: input, shape index: {}]
  %s12 = inlined_call_operand.hbm [shape: bf16[128,256], index: 12, kind: input, shape index: {}]
  %s13 = inlined_call_operand.vmem [shape: f32[1,256], index: 13, kind: input, shape index: {}]
  %s14 = inlined_call_operand.vmem [shape: f32[4,16,1], index: 14, kind: output, shape index: {0}]
  %s15 = inlined_call_operand.vmem [shape: f32[4,16,1], index: 15, kind: output, shape index: {1}]
  %16 = xla_tuple %s14, %s15
  %s17 = sld [smem:[#allocation0]]
  $region129: #{tpu_custom_call.1} parent=0
    _
  %s19 = ssub.s32 1, %s17
  %s20 = scalar_select 0, %s19, %s17
  $region1: #{tpu_custom_call.1} parent=0
    #allocation3 [shape = 'u8[16384]{0}', space=vmem, size = 0x4000, scoped, tag = 'input window, operand 0']
    #allocation4 [shape = 's32[2]{0}', space=sflag, size = 0x8, scoped, tag = 'scoped memory for tpu_custom_call.1']
    #allocation5 [shape = 'u8[8192]{0}', space=vmem, size = 0x2000, scoped, tag = 'input window, operand 1']
    #allocation6 [shape = 's32[2]{0}', space=sflag, size = 0x8, scoped, tag = 'scoped memory for tpu_custom_call.1']
    #allocation7 [shape = 'u8[65536]{0}', space=vmem, size = 0x10000, scoped, tag = 'input window, operand 2, single buffered']
    #allocation8 [shape = 'u8[32768]{0}', space=vmem, size = 0x8000, scoped, tag = 'input window, operand 5, single buffered']
    #allocation9 [shape = 's32[1]{0}', space=sflag, size = 0x4, scoped, tag = 'scoped memory for tpu_custom_call.1']
    #allocation10 [shape = 'u8[32768]{0}', space=vmem, size = 0x8000, scoped, tag = 'input window, operand 7, single buffered']
    #allocation11 [shape = 'u8[32768]{0}', space=vmem, size = 0x8000, scoped, tag = 'input window, operand 9, single buffered']
    #allocation12 [shape = 's32[1]{0}', space=sflag, size = 0x4, scoped, tag = 'scoped memory for tpu_custom_call.1']
    #allocation13 [shape = 'u8[65536]{0}', space=vmem, size = 0x10000, scoped, tag = 'input window, operand 12, single buffered']
    %21 = vsyncpa [#allocation4], 0
    %s22 = scalar_lea.sflag [#allocation4], 1
    %23 = vsyncpa %s22, 0
    %24 = vsyncpa [#allocation6], 0
    %s25 = scalar_lea.sflag [#allocation6], 1
    %26 = vsyncpa %s25, 0
    %27 = vsyncpa [#allocation9], 0
    %28 = vsyncpa [#allocation12], 0
    loop: start=0, step=1, limit=10
    $region2: #{tpu_custom_call.1} parent=1 // loop_pre_header
      _
    $region3: #{tpu_custom_call.1} parent=1 // loop_header
      %s30 = sphi 0, %s34
      %p31 = scmp.ge.s32.totalorder %s30, 10
      %s37 = sphi 0, %s49
      %s38 = sphi 0, %s45
      %s39 = sphi 0, %s37
      %s40 = sphi 0, %s38
      %s41 = sphi 0, %s39
      %s42 = sphi 0, %s40
      %s52 = sphi 0, %s54
      %s55 = sphi 0, %s52
      %s56 = sphi 0, %s55
      %s72 = sphi 0, %s56
      %s80 = sphi 0, %s82
      %s83 = sphi 0, %s80
      %s84 = sphi 0, %s83
      %s100 = sphi 0, %s84
      %s104 = sphi 0, %s104
      %s106 = sphi 0, %s104
      %s107 = sphi 0, %s106
      %s121 = sphi 0, %s107
      %s127 = sphi 0, %s129
      %s130 = sphi 0, %s127
      %s131 = sphi 0, %s130
      %s147 = sphi 0, %s131
      %s151 = sphi 0, %s151
      %s153 = sphi 0, %s151
      %s154 = sphi 0, %s153
      %s168 = sphi 0, %s154
      %s172 = sphi 0, %s172
      %s174 = sphi 0, %s172
      %s175 = sphi 0, %s174
      %s189 = sphi 0, %s175
      %s193 = sphi 0, %s193
      %s195 = sphi 0, %s193
      %s196 = sphi 0, %s195
      %s210 = sphi 0, %s196
      %s214 = sphi 0, %s214
      %s216 = sphi 0, %s214
      %s217 = sphi 0, %s216
      %s231 = sphi 0, %s217
      %s235 = sphi 0, %s235
      %s237 = sphi 0, %s235
      %s238 = sphi 0, %s237
      %s252 = sphi 0, %s238
      %s256 = sphi 0, %s256
      %s258 = sphi 0, %s256
      %s259 = sphi 0, %s258
      %s273 = sphi 0, %s259
      %s279 = sphi 0, %s281
      %s282 = sphi 0, %s279
      %s283 = sphi 0, %s282
      %s299 = sphi 0, %s283
      %s303 = sphi 0, %s303
      %s305 = sphi 0, %s303
      %s306 = sphi 0, %s305
      %s320 = sphi 0, %s306
      %s324 = sphi 0, %s324
      %s326 = sphi 0, %s324
      %s327 = sphi 0, %s326
      %s341 = sphi 0, %s327
      %s345 = sphi 0, %s345
      %s347 = sphi 0, %s345
      %s348 = sphi 0, %s347
      %s362 = sphi 0, %s348
      %s370 = sphi 0, %s372
      %s373 = sphi 0, %s370
      %s374 = sphi 0, %s373
      %s390 = sphi 0, %s374
      %s398 = sphi 0, %s400
      %s401 = sphi 0, %s398
      %s402 = sphi 0, %s401
      %s418 = sphi 0, %s402
    $region4: #{tpu_custom_call.1} parent=1 // loop_header_branch
      %33 = sbr.rel (%p31) target = $region8
    $region5: #{tpu_custom_call.1} parent=1 // loop_body
      %s35 = ssub.s32 %s30, 1
      %s36 = ssub.s32 %s30, 2
      %s43 = sadd.s32 1, %s38
      %p44 = scmp.ge.s32.totalorder %s43, 4
      %s45 = scalar_select %p44, 0, %s43
      %s46 = sadd.s32 1, %s37
      %s47 = scalar_select %p44, %s46, %s37
      %p48 = scmp.ge.s32.totalorder %s47, 2
      %s49 = scalar_select %p48, 0, %s47
      %s50 = ssub.s32 %s37, %s49
      %p51 = scmp.eq.s32.totalorder %s50, 0
      %s53 = sadd.s32 %s52, 1
      %s54 = scalar_select %p51, %s52, %s53
      %p57 = pneg %p51
      %p58 = scmp.eq.s32.totalorder %s30, 7
      %p59 = por %p57, %p58
      %p60 = scmp.ne.s32.totalorder %s52, %s55
      %p61 = scmp.eq.s32.totalorder %s30, 0
      %p62 = por %p60, %p61
      %p63 = scmp.ne.s32.totalorder %s52, %s55
      %p64 = scmp.eq.s32.totalorder %s35, 7
      %p65 = por %p63, %p64
      %p66 = scmp.ne.s32.totalorder %s55, %s56
      %p67 = scmp.eq.s32.totalorder %s35, 0
      %p68 = por %p66, %p67
      %p69 = scmp.ne.s32.totalorder %s55, %s56
      %p70 = scmp.eq.s32.totalorder %s36, 7
      %p71 = por %p69, %p70
      %p73 = scmp.ne.s32.totalorder %s56, %s72
      %p74 = scmp.eq.s32.totalorder %s36, 0
      %p75 = por %p73, %p74
      %s76 = ssub.s32 %s38, %s45
      %s77 = ssub.s32 %s37, %s49
      %s78 = sor.u32 %s76, %s77
      %p79 = scmp.eq.s32.totalorder %s78, 0
      %s81 = sadd.s32 %s80, 1
      %s82 = scalar_select %p79, %s80, %s81
      %p85 = pneg %p79
      %p86 = scmp.eq.s32.totalorder %s30, 7
      %p87 = por %p85, %p86
      %p88 = scmp.ne.s32.totalorder %s80, %s83
      %p89 = scmp.eq.s32.totalorder %s30, 0
      %p90 = por %p88, %p89
      %p91 = scmp.ne.s32.totalorder %s80, %s83
      %p92 = scmp.eq.s32.totalorder %s35, 7
      %p93 = por %p91, %p92
      %p94 = scmp.ne.s32.totalorder %s83, %s84
      %p95 = scmp.eq.s32.totalorder %s35, 0
      %p96 = por %p94, %p95
      %p97 = scmp.ne.s32.totalorder %s83, %s84
      %p98 = scmp.eq.s32.totalorder %s36, 7
      %p99 = por %p97, %p98
      %p101 = scmp.ne.s32.totalorder %s84, %s100
      %p102 = scmp.eq.s32.totalorder %s36, 0
      %p103 = por %p101, %p102
      %s105 = sadd.s32 %s104, 1
      %p108 = scmp.eq.s32.totalorder %s30, 7
      %p109 = scmp.ne.s32.totalorder %s104, %s106
      %p110 = scmp.eq.s32.totalorder %s30, 0
      %p111 = por %p109, %p110
      %p112 = scmp.ne.s32.totalorder %s104, %s106
      %p113 = scmp.eq.s32.totalorder %s35, 7
      %p114 = por %p112, %p113
      %p115 = scmp.ne.s32.totalorder %s106, %s107
      %p116 = scmp.eq.s32.totalorder %s35, 0
      %p117 = por %p115, %p116
      %p118 = scmp.ne.s32.totalorder %s106, %s107
      %p119 = scmp.eq.s32.totalorder %s36, 7
      %p120 = por %p118, %p119
      %p122 = scmp.ne.s32.totalorder %s107, %s121
      %p123 = scmp.eq.s32.totalorder %s36, 0
      %p124 = por %p122, %p123
      %s125 = ssub.s32 %s38, %s45
      %p126 = scmp.eq.s32.totalorder %s125, 0
      %s128 = sadd.s32 %s127, 1
      %s129 = scalar_select %p126, %s127, %s128
      %p132 = pneg %p126
      %p133 = scmp.eq.s32.totalorder %s30, 7
      %p134 = por %p132, %p133
      %p135 = scmp.ne.s32.totalorder %s127, %s130
      %p136 = scmp.eq.s32.totalorder %s30, 0
      %p137 = por %p135, %p136
      %p138 = scmp.ne.s32.totalorder %s127, %s130
      %p139 = scmp.eq.s32.totalorder %s35, 7
      %p140 = por %p138, %p139
      %p141 = scmp.ne.s32.totalorder %s130, %s131
      %p142 = scmp.eq.s32.totalorder %s35, 0
      %p143 = por %p141, %p142
      %p144 = scmp.ne.s32.totalorder %s130, %s131
      %p145 = scmp.eq.s32.totalorder %s36, 7
      %p146 = por %p144, %p145
      %p148 = scmp.ne.s32.totalorder %s131, %s147
      %p149 = scmp.eq.s32.totalorder %s36, 0
      %p150 = por %p148, %p149
      %s152 = sadd.s32 %s151, 1
      %p155 = scmp.eq.s32.totalorder %s30, 7
      %p156 = scmp.ne.s32.totalorder %s151, %s153
      %p157 = scmp.eq.s32.totalorder %s30, 0
      %p158 = por %p156, %p157
      %p159 = scmp.ne.s32.totalorder %s151, %s153
      %p160 = scmp.eq.s32.totalorder %s35, 7
      %p161 = por %p159, %p160
      %p162 = scmp.ne.s32.totalorder %s153, %s154
      %p163 = scmp.eq.s32.totalorder %s35, 0
      %p164 = por %p162, %p163
      %p165 = scmp.ne.s32.totalorder %s153, %s154
      %p166 = scmp.eq.s32.totalorder %s36, 7
      %p167 = por %p165, %p166
      %p169 = scmp.ne.s32.totalorder %s154, %s168
      %p170 = scmp.eq.s32.totalorder %s36, 0
      %p171 = por %p169, %p170
      %s173 = sadd.s32 %s172, 1
      %p176 = scmp.eq.s32.totalorder %s30, 7
      %p177 = scmp.ne.s32.totalorder %s172, %s174
      %p178 = scmp.eq.s32.totalorder %s30, 0
      %p179 = por %p177, %p178
      %p180 = scmp.ne.s32.totalorder %s172, %s174
      %p181 = scmp.eq.s32.totalorder %s35, 7
      %p182 = por %p180, %p181
      %p183 = scmp.ne.s32.totalorder %s174, %s175
      %p184 = scmp.eq.s32.totalorder %s35, 0
      %p185 = por %p183, %p184
      %p186 = scmp.ne.s32.totalorder %s174, %s175
      %p187 = scmp.eq.s32.totalorder %s36, 7
      %p188 = por %p186, %p187
      %p190 = scmp.ne.s32.totalorder %s175, %s189
      %p191 = scmp.eq.s32.totalorder %s36, 0
      %p192 = por %p190, %p191
      %s194 = sadd.s32 %s193, 1
      %p197 = scmp.eq.s32.totalorder %s30, 7
      %p198 = scmp.ne.s32.totalorder %s193, %s195
      %p199 = scmp.eq.s32.totalorder %s30, 0
      %p200 = por %p198, %p199
      %p201 = scmp.ne.s32.totalorder %s193, %s195
      %p202 = scmp.eq.s32.totalorder %s35, 7
      %p203 = por %p201, %p202
      %p204 = scmp.ne.s32.totalorder %s195, %s196
      %p205 = scmp.eq.s32.totalorder %s35, 0
      %p206 = por %p204, %p205
      %p207 = scmp.ne.s32.totalorder %s195, %s196
      %p208 = scmp.eq.s32.totalorder %s36, 7
      %p209 = por %p207, %p208
      %p211 = scmp.ne.s32.totalorder %s196, %s210
      %p212 = scmp.eq.s32.totalorder %s36, 0
      %p213 = por %p211, %p212
      %s215 = sadd.s32 %s214, 1
      %p218 = scmp.eq.s32.totalorder %s30, 7
      %p219 = scmp.ne.s32.totalorder %s214, %s216
      %p220 = scmp.eq.s32.totalorder %s30, 0
      %p221 = por %p219, %p220
      %p222 = scmp.ne.s32.totalorder %s214, %s216
      %p223 = scmp.eq.s32.totalorder %s35, 7
      %p224 = por %p222, %p223
      %p225 = scmp.ne.s32.totalorder %s216, %s217
      %p226 = scmp.eq.s32.totalorder %s35, 0
      %p227 = por %p225, %p226
      %p228 = scmp.ne.s32.totalorder %s216, %s217
      %p229 = scmp.eq.s32.totalorder %s36, 7
      %p230 = por %p228, %p229
      %p232 = scmp.ne.s32.totalorder %s217, %s231
      %p233 = scmp.eq.s32.totalorder %s36, 0
      %p234 = por %p232, %p233
      %s236 = sadd.s32 %s235, 1
      %p239 = scmp.eq.s32.totalorder %s30, 7
      %p240 = scmp.ne.s32.totalorder %s235, %s237
      %p241 = scmp.eq.s32.totalorder %s30, 0
      %p242 = por %p240, %p241
      %p243 = scmp.ne.s32.totalorder %s235, %s237
      %p244 = scmp.eq.s32.totalorder %s35, 7
      %p245 = por %p243, %p244
      %p246 = scmp.ne.s32.totalorder %s237, %s238
      %p247 = scmp.eq.s32.totalorder %s35, 0
      %p248 = por %p246, %p247
      %p249 = scmp.ne.s32.totalorder %s237, %s238
      %p250 = scmp.eq.s32.totalorder %s36, 7
      %p251 = por %p249, %p250
      %p253 = scmp.ne.s32.totalorder %s238, %s252
      %p254 = scmp.eq.s32.totalorder %s36, 0
      %p255 = por %p253, %p254
      %s257 = sadd.s32 %s256, 1
      %p260 = scmp.eq.s32.totalorder %s30, 7
      %p261 = scmp.ne.s32.totalorder %s256, %s258
      %p262 = scmp.eq.s32.totalorder %s30, 0
      %p263 = por %p261, %p262
      %p264 = scmp.ne.s32.totalorder %s256, %s258
      %p265 = scmp.eq.s32.totalorder %s35, 7
      %p266 = por %p264, %p265
      %p267 = scmp.ne.s32.totalorder %s258, %s259
      %p268 = scmp.eq.s32.totalorder %s35, 0
      %p269 = por %p267, %p268
      %p270 = scmp.ne.s32.totalorder %s258, %s259
      %p271 = scmp.eq.s32.totalorder %s36, 7
      %p272 = por %p270, %p271
      %p274 = scmp.ne.s32.totalorder %s259, %s273
      %p275 = scmp.eq.s32.totalorder %s36, 0
      %p276 = por %p274, %p275
      %s277 = ssub.s32 %s38, %s45
      %p278 = scmp.eq.s32.totalorder %s277, 0
      %s280 = sadd.s32 %s279, 1
      %s281 = scalar_select %p278, %s279, %s280
      %p284 = pneg %p278
      %p285 = scmp.eq.s32.totalorder %s30, 7
      %p286 = por %p284, %p285
      %p287 = scmp.ne.s32.totalorder %s279, %s282
      %p288 = scmp.eq.s32.totalorder %s30, 0
      %p289 = por %p287, %p288
      %p290 = scmp.ne.s32.totalorder %s279, %s282
      %p291 = scmp.eq.s32.totalorder %s35, 7
      %p292 = por %p290, %p291
      %p293 = scmp.ne.s32.totalorder %s282, %s283
      %p294 = scmp.eq.s32.totalorder %s35, 0
      %p295 = por %p293, %p294
      %p296 = scmp.ne.s32.totalorder %s282, %s283
      %p297 = scmp.eq.s32.totalorder %s36, 7
      %p298 = por %p296, %p297
      %p300 = scmp.ne.s32.totalorder %s283, %s299
      %p301 = scmp.eq.s32.totalorder %s36, 0
      %p302 = por %p300, %p301
      %s304 = sadd.s32 %s303, 1
      %p307 = scmp.eq.s32.totalorder %s30, 7
      %p308 = scmp.ne.s32.totalorder %s303, %s305
      %p309 = scmp.eq.s32.totalorder %s30, 0
      %p310 = por %p308, %p309
      %p311 = scmp.ne.s32.totalorder %s303, %s305
      %p312 = scmp.eq.s32.totalorder %s35, 7
      %p313 = por %p311, %p312
      %p314 = scmp.ne.s32.totalorder %s305, %s306
      %p315 = scmp.eq.s32.totalorder %s35, 0
      %p316 = por %p314, %p315
      %p317 = scmp.ne.s32.totalorder %s305, %s306
      %p318 = scmp.eq.s32.totalorder %s36, 7
      %p319 = por %p317, %p318
      %p321 = scmp.ne.s32.totalorder %s306, %s320
      %p322 = scmp.eq.s32.totalorder %s36, 0
      %p323 = por %p321, %p322
      %s325 = sadd.s32 %s324, 1
      %p328 = scmp.eq.s32.totalorder %s30, 7
      %p329 = scmp.ne.s32.totalorder %s324, %s326
      %p330 = scmp.eq.s32.totalorder %s30, 0
      %p331 = por %p329, %p330
      %p332 = scmp.ne.s32.totalorder %s324, %s326
      %p333 = scmp.eq.s32.totalorder %s35, 7
      %p334 = por %p332, %p333
      %p335 = scmp.ne.s32.totalorder %s326, %s327
      %p336 = scmp.eq.s32.totalorder %s35, 0
      %p337 = por %p335, %p336
      %p338 = scmp.ne.s32.totalorder %s326, %s327
      %p339 = scmp.eq.s32.totalorder %s36, 7
      %p340 = por %p338, %p339
      %p342 = scmp.ne.s32.totalorder %s327, %s341
      %p343 = scmp.eq.s32.totalorder %s36, 0
      %p344 = por %p342, %p343
      %s346 = sadd.s32 %s345, 1
      %p349 = scmp.eq.s32.totalorder %s30, 7
      %p350 = scmp.ne.s32.totalorder %s345, %s347
      %p351 = scmp.eq.s32.totalorder %s30, 0
      %p352 = por %p350, %p351
      %p353 = scmp.ne.s32.totalorder %s345, %s347
      %p354 = scmp.eq.s32.totalorder %s35, 7
      %p355 = por %p353, %p354
      %p356 = scmp.ne.s32.totalorder %s347, %s348
      %p357 = scmp.eq.s32.totalorder %s35, 0
      %p358 = por %p356, %p357
      %p359 = scmp.ne.s32.totalorder %s347, %s348
      %p360 = scmp.eq.s32.totalorder %s36, 7
      %p361 = por %p359, %p360
      %p363 = scmp.ne.s32.totalorder %s348, %s362
      %p364 = scmp.eq.s32.totalorder %s36, 0
      %p365 = por %p363, %p364
      %s366 = ssub.s32 %s38, %s45
      %s367 = ssub.s32 %s37, %s49
      %s368 = sor.u32 %s366, %s367
      %p369 = scmp.eq.s32.totalorder %s368, 0
      %s371 = sadd.s32 %s370, 1
      %s372 = scalar_select %p369, %s370, %s371
      %p375 = pneg %p369
      %p376 = scmp.eq.s32.totalorder %s30, 7
      %p377 = por %p375, %p376
      %p378 = scmp.ne.s32.totalorder %s370, %s373
      %p379 = scmp.eq.s32.totalorder %s30, 0
      %p380 = por %p378, %p379
      %p381 = scmp.ne.s32.totalorder %s370, %s373
      %p382 = scmp.eq.s32.totalorder %s35, 7
      %p383 = por %p381, %p382
      %p384 = scmp.ne.s32.totalorder %s373, %s374
      %p385 = scmp.eq.s32.totalorder %s35, 0
      %p386 = por %p384, %p385
      %p387 = scmp.ne.s32.totalorder %s373, %s374
      %p388 = scmp.eq.s32.totalorder %s36, 7
      %p389 = por %p387, %p388
      %p391 = scmp.ne.s32.totalorder %s374, %s390
      %p392 = scmp.eq.s32.totalorder %s36, 0
      %p393 = por %p391, %p392
      %s394 = ssub.s32 %s38, %s45
      %s395 = ssub.s32 %s37, %s49
      %s396 = sor.u32 %s394, %s395
      %p397 = scmp.eq.s32.totalorder %s396, 0
      %s399 = sadd.s32 %s398, 1
      %s400 = scalar_select %p397, %s398, %s399
      %p403 = pneg %p397
      %p404 = scmp.eq.s32.totalorder %s30, 7
      %p405 = por %p403, %p404
      %p406 = scmp.ne.s32.totalorder %s398, %s401
      %p407 = scmp.eq.s32.totalorder %s30, 0
      %p408 = por %p406, %p407
      %p409 = scmp.ne.s32.totalorder %s398, %s401
      %p410 = scmp.eq.s32.totalorder %s35, 7
      %p411 = por %p409, %p410
      %p412 = scmp.ne.s32.totalorder %s401, %s402
      %p413 = scmp.eq.s32.totalorder %s35, 0
      %p414 = por %p412, %p413
      %p415 = scmp.ne.s32.totalorder %s401, %s402
      %p416 = scmp.eq.s32.totalorder %s36, 7
      %p417 = por %p415, %p416
      %p419 = scmp.ne.s32.totalorder %s402, %s418
      %p420 = scmp.eq.s32.totalorder %s36, 0
      %p421 = por %p419, %p420
      %p422 = scmp.le.s32.totalorder 1, %s30
      %p423 = scmp.lt.s32.totalorder %s30, 9
      %p424 = pnand %p422, %p423
      %p425 = pneg %p424
      // Predicated region
      $region9: #{tpu_custom_call.1} parent=5 // pred_check
        _
      $region10: #{tpu_custom_call.1} parent=5 // pred_check_branch
        %427 = sbr.rel (%p424) target = $region12
      $region11: #{tpu_custom_call.1} parent=5 // pred_region
        %s428 = ssub.s32 %s30, 1
        // Predicated region
        $region13: #{tpu_custom_call.1} parent=11 // pred_check
          %p429 = pneg %p117
        $region14: #{tpu_custom_call.1} parent=11 // pred_check_branch
          %431 = sbr.rel (%p429) target = $region16
        $region15: #{tpu_custom_call.1} parent=11 // pred_region
          %s433 = ssub.s32 2048, 2048
          %434 = vsyncadd [#allocation6], %s433
          %s435 = sshll.u32 [#allocation7], 4
          %s436 = int_to_ptr.vmem [resolvable:$true] %s435
          %441 = dma.hbm_to_vmem [thread:$0]  %s2, 2048, %s436, [#allocation6], 64, 64, 4
        $region16: #{tpu_custom_call.1} parent=11 // pred_fallthru
          _
        // Predicated region
        $region17: #{tpu_custom_call.1} parent=11 // pred_check
          %p442 = pneg %p164
        $region18: #{tpu_custom_call.1} parent=11 // pred_check_branch
          %444 = sbr.rel (%p442) target = $region20
        $region19: #{tpu_custom_call.1} parent=11 // pred_region
          _
        $region20: #{tpu_custom_call.1} parent=11 // pred_fallthru
          _
        // Predicated region
        $region21: #{tpu_custom_call.1} parent=11 // pred_check
          %p445 = pneg %p185
        $region22: #{tpu_custom_call.1} parent=11 // pred_check_branch
          %447 = sbr.rel (%p445) target = $region24
        $region23: #{tpu_custom_call.1} parent=11 // pred_region
          %s449 = ssub.s32 1024, 1024
          %450 = vsyncadd [#allocation9], %s449
          %s451 = sshll.u32 [#allocation8], 4
          %s452 = int_to_ptr.vmem [resolvable:$true] %s451
          %457 = dma.hbm_to_vmem [thread:$0]  %s5, 1024, %s452, [#allocation9], 64, 64, 4
        $region24: #{tpu_custom_call.1} parent=11 // pred_fallthru
          _
        // Predicated region
        $region25: #{tpu_custom_call.1} parent=11 // pred_check
          %p458 = pneg %p206
        $region26: #{tpu_custom_call.1} parent=11 // pred_check_branch
          %460 = sbr.rel (%p458) target = $region28
        $region27: #{tpu_custom_call.1} parent=11 // pred_region
          _
        $region28: #{tpu_custom_call.1} parent=11 // pred_fallthru
          _
        // Predicated region
        $region29: #{tpu_custom_call.1} parent=11 // pred_check
          %p461 = pneg %p227
        $region30: #{tpu_custom_call.1} parent=11 // pred_check_branch
          %463 = sbr.rel (%p461) target = $region32
        $region31: #{tpu_custom_call.1} parent=11 // pred_region
          %s465 = ssub.s32 1024, 1024
          %466 = vsyncadd [#allocation9], %s465
          %s467 = sshll.u32 [#allocation10], 4
          %s468 = int_to_ptr.vmem [resolvable:$true] %s467
          %473 = dma.hbm_to_vmem [thread:$0]  %s7, 1024, %s468, [#allocation9], 64, 64, 4
        $region32: #{tpu_custom_call.1} parent=11 // pred_fallthru
          _
        // Predicated region
        $region33: #{tpu_custom_call.1} parent=11 // pred_check
          %p474 = pneg %p248
        $region34: #{tpu_custom_call.1} parent=11 // pred_check_branch
          %476 = sbr.rel (%p474) target = $region36
        $region35: #{tpu_custom_call.1} parent=11 // pred_region
          _
        $region36: #{tpu_custom_call.1} parent=11 // pred_fallthru
          _
        // Predicated region
        $region37: #{tpu_custom_call.1} parent=11 // pred_check
          %p477 = pneg %p269
        $region38: #{tpu_custom_call.1} parent=11 // pred_check_branch
          %479 = sbr.rel (%p477) target = $region40
        $region39: #{tpu_custom_call.1} parent=11 // pred_region
          %s481 = ssub.s32 1024, 1024
          %482 = vsyncadd [#allocation12], %s481
          %s483 = sshll.u32 [#allocation11], 4
          %s484 = int_to_ptr.vmem [resolvable:$true] %s483
          %489 = dma.hbm_to_vmem [thread:$0]  %s9, 1024, %s484, [#allocation12], 64, 64, 4
        $region40: #{tpu_custom_call.1} parent=11 // pred_fallthru
          _
        // Predicated region
        $region41: #{tpu_custom_call.1} parent=11 // pred_check
          %p490 = pneg %p316
        $region42: #{tpu_custom_call.1} parent=11 // pred_check_branch
          %492 = sbr.rel (%p490) target = $region44
        $region43: #{tpu_custom_call.1} parent=11 // pred_region
          _
        $region44: #{tpu_custom_call.1} parent=11 // pred_fallthru
          _
        // Predicated region
        $region45: #{tpu_custom_call.1} parent=11 // pred_check
          %p493 = pneg %p337
        $region46: #{tpu_custom_call.1} parent=11 // pred_check_branch
          %495 = sbr.rel (%p493) target = $region48
        $region47: #{tpu_custom_call.1} parent=11 // pred_region
          %s497 = ssub.s32 2048, 2048
          %498 = vsyncadd [#allocation12], %s497
          %s499 = sshll.u32 [#allocation13], 4
          %s500 = int_to_ptr.vmem [resolvable:$true] %s499
          %505 = dma.hbm_to_vmem [thread:$0]  %s12, 2048, %s500, [#allocation12], 128, 128, 8
        $region48: #{tpu_custom_call.1} parent=11 // pred_fallthru
          _
        // Predicated region
        $region49: #{tpu_custom_call.1} parent=11 // pred_check
          %p506 = pneg %p358
        $region50: #{tpu_custom_call.1} parent=11 // pred_check_branch
          %508 = sbr.rel (%p506) target = $region52
        $region51: #{tpu_custom_call.1} parent=11 // pred_region
          _
        $region52: #{tpu_custom_call.1} parent=11 // pred_fallthru
          _
      $region12: #{tpu_custom_call.1} parent=5 // pred_fallthru
        _
      %p509 = scmp.lt.s32.totalorder %s30, 8
      // Predicated region
      $region53: #{tpu_custom_call.1} parent=5 // pred_check
        %p510 = pneg %p509
      $region54: #{tpu_custom_call.1} parent=5 // pred_check_branch
        %512 = sbr.rel (%p510) target = $region56
      $region55: #{tpu_custom_call.1} parent=5 // pred_region
        // Predicated region
        $region57: #{tpu_custom_call.1} parent=55 // pred_check
          %p513 = pneg %p62
        $region58: #{tpu_custom_call.1} parent=55 // pred_check_branch
          %515 = sbr.rel (%p513) target = $region60
        $region59: #{tpu_custom_call.1} parent=55 // pred_region
          %s516 = sand.u32 %s52, 1
          %s517 = scalar_lea.sflag [#allocation4], %s516
          %s518 = sand.u32 %s52, 1
          %s519 = smul.addr %s518, 16
          %s520 = scalar_lea.vmem [#allocation3], %s519
          %s522 = ssub.s32 256, 256
          %523 = vsyncadd %s517, %s522
          %s524 = smul.addr %s37, 2
          %s525 = smul.addr %s524, 128
          %s526 = scalar_lea.hbm %s0, %s525
          %s528 = sshll.u32 %s520, 4
          %s529 = int_to_ptr.vmem [resolvable:$true] %s528
          %531 = dma.hbm_to_vmem [thread:$0]  %s526, 256, %s529, %s517
        $region60: #{tpu_custom_call.1} parent=55 // pred_fallthru
          _
        // Predicated region
        $region61: #{tpu_custom_call.1} parent=55 // pred_check
          %p532 = pneg %p90
        $region62: #{tpu_custom_call.1} parent=55 // pred_check_branch
          %534 = sbr.rel (%p532) target = $region64
        $region63: #{tpu_custom_call.1} parent=55 // pred_region
          %s535 = sand.u32 %s30, 1
          %s536 = scalar_lea.sflag [#allocation6], %s535
          %s537 = sand.u32 %s80, 1
          %s538 = smul.addr %s537, 8
          %s539 = scalar_lea.vmem [#allocation5], %s538
          %s541 = ssub.s32 128, 128
          %542 = vsyncadd %s536, %s541
          %s543 = smul.addr %s38, 2
          %s544 = sadd.s32 %s37, %s543
          %s545 = smul.addr %s544, 128
          %s546 = scalar_lea.hbm %s1, %s545
          %s548 = sshll.u32 %s539, 4
          %s549 = int_to_ptr.vmem [resolvable:$true] %s548
          %551 = dma.hbm_to_vmem [thread:$0]  %s546, 128, %s549, %s536
        $region64: #{tpu_custom_call.1} parent=55 // pred_fallthru
          _
        // Predicated region
        $region65: #{tpu_custom_call.1} parent=55 // pred_check
          %p552 = pneg %p137
        $region66: #{tpu_custom_call.1} parent=55 // pred_check_branch
          %554 = sbr.rel (%p552) target = $region68
        $region67: #{tpu_custom_call.1} parent=55 // pred_region
          %p555 = scmp.lt.s32.totalorder %s38, 3
          %s556 = scalar_select %p555, %s38, 3
          %s557 = scalar_lea.vmem %s3, %s556
        $region68: #{tpu_custom_call.1} parent=55 // pred_fallthru
          _
        // Predicated region
        $region69: #{tpu_custom_call.1} parent=55 // pred_check
          %p558 = pneg %p289
        $region70: #{tpu_custom_call.1} parent=55 // pred_check_branch
          %560 = sbr.rel (%p558) target = $region72
        $region71: #{tpu_custom_call.1} parent=55 // pred_region
          %p561 = scmp.lt.s32.totalorder %s38, 3
          %s562 = scalar_select %p561, %s38, 3
          %s563 = scalar_lea.vmem %s10, %s562
        $region72: #{tpu_custom_call.1} parent=55 // pred_fallthru
          _
      $region56: #{tpu_custom_call.1} parent=5 // pred_fallthru
        _
      %p564 = scmp.le.s32.totalorder 1, %s30
      %p565 = scmp.lt.s32.totalorder %s30, 9
      %p566 = pnand %p564, %p565
      %p567 = pneg %p566
      // Predicated region
      $region73: #{tpu_custom_call.1} parent=5 // pred_check
        _
      $region74: #{tpu_custom_call.1} parent=5 // pred_check_branch
        %569 = sbr.rel (%p566) target = $region76
      $region75: #{tpu_custom_call.1} parent=5 // pred_region
        %s570 = ssub.s32 %s30, 1
        %s571 = sand.u32 %s55, 1
        %s572 = scalar_lea.sflag [#allocation4], %s571
        %s573 = sand.u32 %s55, 1
        %s574 = smul.addr %s573, 16
        %s575 = scalar_lea.vmem [#allocation3], %s574
        // Predicated region
        $region77: #{tpu_custom_call.1} parent=75 // pred_check
          %p576 = pneg %p68
        $region78: #{tpu_custom_call.1} parent=75 // pred_check_branch
          %578 = sbr.rel (%p576) target = $region80
        $region79: #{tpu_custom_call.1} parent=75 // pred_region
          %579 = dma.done %s572, 256
        $region80: #{tpu_custom_call.1} parent=75 // pred_fallthru
          _
        %s580 = sand.u32 %s35, 1
        %s581 = scalar_lea.sflag [#allocation6], %s580
        %s582 = sand.u32 %s83, 1
        %s583 = smul.addr %s582, 8
        %s584 = scalar_lea.vmem [#allocation5], %s583
        // Predicated region
        $region81: #{tpu_custom_call.1} parent=75 // pred_check
          %p585 = pneg %p96
        $region82: #{tpu_custom_call.1} parent=75 // pred_check_branch
          %587 = sbr.rel (%p585) target = $region84
        $region83: #{tpu_custom_call.1} parent=75 // pred_region
          %588 = dma.done %s581, 128
        $region84: #{tpu_custom_call.1} parent=75 // pred_fallthru
          _
        // Predicated region
        $region85: #{tpu_custom_call.1} parent=75 // pred_check
          %p589 = pneg %p117
        $region86: #{tpu_custom_call.1} parent=75 // pred_check_branch
          %591 = sbr.rel (%p589) target = $region88
        $region87: #{tpu_custom_call.1} parent=75 // pred_region
          %592 = dma.done [#allocation6], 2048
        $region88: #{tpu_custom_call.1} parent=75 // pred_fallthru
          _
        // Predicated region
        $region89: #{tpu_custom_call.1} parent=75 // pred_check
          %p593 = pneg %p185
        $region90: #{tpu_custom_call.1} parent=75 // pred_check_branch
          %595 = sbr.rel (%p593) target = $region92
        $region91: #{tpu_custom_call.1} parent=75 // pred_region
          %596 = dma.done [#allocation9], 1024
        $region92: #{tpu_custom_call.1} parent=75 // pred_fallthru
          _
        // Predicated region
        $region93: #{tpu_custom_call.1} parent=75 // pred_check
          %p597 = pneg %p227
        $region94: #{tpu_custom_call.1} parent=75 // pred_check_branch
          %599 = sbr.rel (%p597) target = $region96
        $region95: #{tpu_custom_call.1} parent=75 // pred_region
          %600 = dma.done [#allocation9], 1024
        $region96: #{tpu_custom_call.1} parent=75 // pred_fallthru
          _
        // Predicated region
        $region97: #{tpu_custom_call.1} parent=75 // pred_check
          %p601 = pneg %p269
        $region98: #{tpu_custom_call.1} parent=75 // pred_check_branch
          %603 = sbr.rel (%p601) target = $region100
        $region99: #{tpu_custom_call.1} parent=75 // pred_region
          %604 = dma.done [#allocation12], 1024
        $region100: #{tpu_custom_call.1} parent=75 // pred_fallthru
          _
        // Predicated region
        $region101: #{tpu_custom_call.1} parent=75 // pred_check
          %p605 = pneg %p337
        $region102: #{tpu_custom_call.1} parent=75 // pred_check_branch
          %607 = sbr.rel (%p605) target = $region104
        $region103: #{tpu_custom_call.1} parent=75 // pred_region
          %608 = dma.done [#allocation12], 2048
        $region104: #{tpu_custom_call.1} parent=75 // pred_fallthru
          _
        %s609 = sand.u32 %s55, 1
        %s610 = scalar_lea.sflag [#allocation4], %s609
        %s611 = sand.u32 %s55, 1
        %s612 = smul.addr %s611, 16
        %s613 = scalar_lea.vmem [#allocation3], %s612
        %p614 = pneg %p68
        %p615 = pneg %p65
        %s616 = sand.u32 %s35, 1
        %s617 = scalar_lea.sflag [#allocation6], %s616
        %s618 = sand.u32 %s83, 1
        %s619 = smul.addr %s618, 8
        %s620 = scalar_lea.vmem [#allocation5], %s619
        %p621 = pneg %p96
        %p622 = pneg %p93
        %p623 = pneg %p117
        %p624 = pneg %p114
        %p625 = scmp.lt.s32.totalorder %s40, 3
        %s626 = scalar_select %p625, %s40, 3
        %s627 = scalar_lea.vmem %s3, %s626
        %p628 = pneg %p143
        %p629 = pneg %p140
        %p630 = pneg %p164
        %p631 = pneg %p161
        %p632 = pneg %p185
        %p633 = pneg %p182
        %p634 = pneg %p206
        %p635 = pneg %p203
        %p636 = pneg %p227
        %p637 = pneg %p224
        %p638 = pneg %p248
        %p639 = pneg %p245
        %p640 = pneg %p269
        %p641 = pneg %p266
        %p642 = scmp.lt.s32.totalorder %s40, 3
        %s643 = scalar_select %p642, %s40, 3
        %s644 = scalar_lea.vmem %s10, %s643
        %p645 = pneg %p295
        %p646 = pneg %p292
        %p647 = pneg %p316
        %p648 = pneg %p313
        %p649 = pneg %p337
        %p650 = pneg %p334
        %p651 = pneg %p358
        %p652 = pneg %p355
        %p653 = pneg %p386
        %p654 = pneg %p383
        %p655 = scmp.lt.s32.totalorder %s40, 3
        %s656 = scalar_select %p655, %s40, 3
        %p657 = scmp.lt.s32.totalorder %s39, 1
        %s658 = scalar_select %p657, %s39, 1
        %s659 = smul.addr %s656, 2
        %s660 = sadd.s32 %s658, %s659
        %s661 = smul.addr %s660, 8
        %s662 = scalar_lea.vmem %s14, %s661
        %p663 = pneg %p414
        %p664 = pneg %p411
        %p665 = scmp.lt.s32.totalorder %s40, 3
        %s666 = scalar_select %p665, %s40, 3
        %p667 = scmp.lt.s32.totalorder %s39, 1
        %s668 = scalar_select %p667, %s39, 1
        %s669 = smul.addr %s666, 2
        %s670 = sadd.s32 %s668, %s669
        %s671 = smul.addr %s670, 8
        %s672 = scalar_lea.vmem %s15, %s671
        %p673 = scmp.lt.s32.totalorder %s40, 3
        %s674 = scalar_select %p673, %s40, 3
        %s675 = scalar_lea.vmem %s3, %s674
        %p676 = scmp.lt.s32.totalorder %s40, 3
        %s677 = scalar_select %p676, %s40, 3
        %s678 = scalar_lea.vmem %s10, %s677
        %p679 = scmp.lt.s32.totalorder %s40, 3
        %s680 = scalar_select %p679, %s40, 3
        %p681 = scmp.lt.s32.totalorder %s39, 1
        %s682 = scalar_select %p681, %s39, 1
        %s683 = smul.addr %s680, 2
        %s684 = sadd.s32 %s682, %s683
        %s685 = smul.addr %s684, 8
        %s686 = scalar_lea.vmem %s14, %s685
        %p687 = scmp.lt.s32.totalorder %s40, 3
        %s688 = scalar_select %p687, %s40, 3
        %p689 = scmp.lt.s32.totalorder %s39, 1
        %s690 = scalar_select %p689, %s39, 1
        %s691 = smul.addr %s688, 2
        %s692 = sadd.s32 %s690, %s691
        %s693 = smul.addr %s692, 8
        %s694 = scalar_lea.vmem %s15, %s693
        %v696 = vld [vmem:[%s575] sm:$0xff]
        %v697 = vld [vmem:[%s575 + $0x8] sm:$0xff]
        %p698 = scmp.eq.s32.totalorder %s40, 0
        // Predicated region
        $region105: #{tpu_custom_call.1} parent=75 // pred_check
          %p699 = pneg %p698
        $region106: #{tpu_custom_call.1} parent=75 // pred_check_branch
          %701 = sbr.rel (%p699) target = $region108
        $region107: #{tpu_custom_call.1} parent=75 // pred_region
          %v702 = vpack.c.bf16 %v696, %v696
          %v703 = vpack.c.bf16 %v697, %v697
          %v704 = vld [vmem:[#allocation7] sm:$0xf]
          %v705 = vld [vmem:[#allocation7 + $0x4] sm:$0xf]
          %v706 = vld [vmem:[#allocation7 + $0x8] sm:$0xf]
          %v707 = vld [vmem:[#allocation7 + $0xc] sm:$0xf]
          %v708 = vld [vmem:[#allocation7 + $0x10] sm:$0xf]
          %v709 = vld [vmem:[#allocation7 + $0x14] sm:$0xf]
          %v710 = vld [vmem:[#allocation7 + $0x18] sm:$0xf]
          %v711 = vld [vmem:[#allocation7 + $0x1c] sm:$0xf]
          %v712 = vld [vmem:[#allocation7 + $0x20] sm:$0xf]
          %v713 = vld [vmem:[#allocation7 + $0x24] sm:$0xf]
          %v714 = vld [vmem:[#allocation7 + $0x28] sm:$0xf]
          %v715 = vld [vmem:[#allocation7 + $0x2c] sm:$0xf]
          %v716 = vld [vmem:[#allocation7 + $0x30] sm:$0xf]
          %v717 = vld [vmem:[#allocation7 + $0x34] sm:$0xf]
          %v718 = vld [vmem:[#allocation7 + $0x38] sm:$0xf]
          %v719 = vld [vmem:[#allocation7 + $0x3c] sm:$0xf]
          %v720 = vld [vmem:[#allocation7 + $0x40] sm:$0xf]
          %v721 = vld [vmem:[#allocation7 + $0x44] sm:$0xf]
          %v722 = vld [vmem:[#allocation7 + $0x48] sm:$0xf]
          %v723 = vld [vmem:[#allocation7 + $0x4c] sm:$0xf]
          %v724 = vld [vmem:[#allocation7 + $0x50] sm:$0xf]
          %v725 = vld [vmem:[#allocation7 + $0x54] sm:$0xf]
          %v726 = vld [vmem:[#allocation7 + $0x58] sm:$0xf]
          %v727 = vld [vmem:[#allocation7 + $0x5c] sm:$0xf]
          %v728 = vld [vmem:[#allocation7 + $0x60] sm:$0xf]
          %v729 = vld [vmem:[#allocation7 + $0x64] sm:$0xf]
          %v730 = vld [vmem:[#allocation7 + $0x68] sm:$0xf]
          %v731 = vld [vmem:[#allocation7 + $0x6c] sm:$0xf]
          %v732 = vld [vmem:[#allocation7 + $0x70] sm:$0xf]
          %v733 = vld [vmem:[#allocation7 + $0x74] sm:$0xf]
          %v734 = vld [vmem:[#allocation7 + $0x78] sm:$0xf]
          %v735 = vld [vmem:[#allocation7 + $0x7c] sm:$0xf]
          %v768 = vunpack.c.l.b16 %v704
          %v769 = vunpack.c.l.b16 %v705
          %v770 = vunpack.c.l.b16 %v706
          %v771 = vunpack.c.l.b16 %v707
          %v772 = vunpack.c.l.b16 %v708
          %v773 = vunpack.c.l.b16 %v709
          %v774 = vunpack.c.l.b16 %v710
          %v775 = vunpack.c.l.b16 %v711
          %v776 = vunpack.c.l.b16 %v712
          %v777 = vunpack.c.l.b16 %v713
          %v778 = vunpack.c.l.b16 %v714
          %v779 = vunpack.c.l.b16 %v715
          %v780 = vunpack.c.l.b16 %v716
          %v781 = vunpack.c.l.b16 %v717
          %v782 = vunpack.c.l.b16 %v718
          %v783 = vunpack.c.l.b16 %v719
          %v784 = vunpack.c.l.b16 %v720
          %v785 = vunpack.c.l.b16 %v721
          %v786 = vunpack.c.l.b16 %v722
          %v787 = vunpack.c.l.b16 %v723
          %v788 = vunpack.c.l.b16 %v724
          %v789 = vunpack.c.l.b16 %v725
          %v790 = vunpack.c.l.b16 %v726
          %v791 = vunpack.c.l.b16 %v727
          %v792 = vunpack.c.l.b16 %v728
          %v793 = vunpack.c.l.b16 %v729
          %v794 = vunpack.c.l.b16 %v730
          %v795 = vunpack.c.l.b16 %v731
          %v796 = vunpack.c.l.b16 %v732
          %v797 = vunpack.c.l.b16 %v733
          %v798 = vunpack.c.l.b16 %v734
          %v799 = vunpack.c.l.b16 %v735
          %v800 = vpack.c.b16 %v769, %v768
          %v801 = vpack.c.b16 %v771, %v770
          %v802 = vpack.c.b16 %v773, %v772
          %v803 = vpack.c.b16 %v775, %v774
          %v804 = vpack.c.b16 %v777, %v776
          %v805 = vpack.c.b16 %v779, %v778
          %v806 = vpack.c.b16 %v781, %v780
          %v807 = vpack.c.b16 %v783, %v782
          %v808 = vpack.c.b16 %v785, %v784
          %v809 = vpack.c.b16 %v787, %v786
          %v810 = vpack.c.b16 %v789, %v788
          %v811 = vpack.c.b16 %v791, %v790
          %v812 = vpack.c.b16 %v793, %v792
          %v813 = vpack.c.b16 %v795, %v794
          %v814 = vpack.c.b16 %v797, %v796
          %v815 = vpack.c.b16 %v799, %v798
          %832 = vmatprep.subr.bf16.mxu0 0
          %833 = vmatpush1.bf16.msra.mxu0 %v807
          %834 = vmatprep.subr.bf16.mxu0 0
          %835 = vmatpush1.bf16.msra.mxu0 %v806
          %836 = vmatprep.subr.bf16.mxu0 0
          %837 = vmatpush1.bf16.msra.mxu0 %v805
          %838 = vmatprep.subr.bf16.mxu0 0
          %839 = vmatpush1.bf16.msra.mxu0 %v804
          %840 = vmatprep.subr.bf16.mxu0 0
          %841 = vmatpush1.bf16.msra.mxu0 %v803
          %842 = vmatprep.subr.bf16.mxu0 0
          %843 = vmatpush1.bf16.msra.mxu0 %v802
          %844 = vmatprep.subr.bf16.mxu0 0
          %845 = vmatpush1.bf16.msra.mxu0 %v801
          %846 = vmatprep.subr.bf16.mxu0 0
          %847 = vmatpush1.bf16.msra.mxu0 %v800
          %848 = vmatprep.subr.bf16.mxu0 0
          %849 = vmatpush2.bf16.msra.mxu0 %v815
          %850 = vmatprep.subr.bf16.mxu0 0
          %851 = vmatpush2.bf16.msra.mxu0 %v814
          %852 = vmatprep.subr.bf16.mxu0 0
          %853 = vmatpush2.bf16.msra.mxu0 %v813
          %854 = vmatprep.subr.bf16.mxu0 0
          %855 = vmatpush2.bf16.msra.mxu0 %v812
          %856 = vmatprep.subr.bf16.mxu0 0
          %857 = vmatpush2.bf16.msra.mxu0 %v811
          %858 = vmatprep.subr.bf16.mxu0 0
          %859 = vmatpush2.bf16.msra.mxu0 %v810
          %860 = vmatprep.subr.bf16.mxu0 0
          %861 = vmatpush2.bf16.msra.mxu0 %v809
          %862 = vmatprep.subr.bf16.mxu0 0
          %863 = vmatpush2.bf16.msra.mxu0 %v808
          %864 = vmatprep.mubr.bf16.mxu0 %v703
          %865 = vmatmul.mubr.bf16.gmra.mxu0 %v702
          %v866 = vpop.f32.mrf.mxu0
          %v867 = vadd.f32 0.0, %v866
          %v868 = vpop.f32.mrf.mxu0
          %v869 = vpop.f32.mrf.mxu0
          %v870 = vpop.f32.mrf.mxu0
          %871 = vdwg.mxu0
          %872 = vst [vmem:[#allocation2] sm:$0xff] %v867
        $region108: #{tpu_custom_call.1} parent=75 // pred_fallthru
          _
        %v873 = vld [vmem:[%s584] sm:$0xff]
        %v874 = vld [vmem:[#allocation2] sm:$0xff]
        %v875 = vld [vmem:[%s675] sm:$0x1]
        %v876 = vld [vmem:[%s4] sm:$0x1]
        %v877 = vld [vmem:[#allocation8] sm:$0xf]
        %v878 = vld [vmem:[#allocation8 + $0x4] sm:$0xf]
        %v879 = vld [vmem:[#allocation8 + $0x8] sm:$0xf]
        %v880 = vld [vmem:[#allocation8 + $0xc] sm:$0xf]
        %v881 = vld [vmem:[#allocation8 + $0x10] sm:$0xf]
        %v882 = vld [vmem:[#allocation8 + $0x14] sm:$0xf]
        %v883 = vld [vmem:[#allocation8 + $0x18] sm:$0xf]
        %v884 = vld [vmem:[#allocation8 + $0x1c] sm:$0xf]
        %v885 = vld [vmem:[#allocation8 + $0x20] sm:$0xf]
        %v886 = vld [vmem:[#allocation8 + $0x24] sm:$0xf]
        %v887 = vld [vmem:[#allocation8 + $0x28] sm:$0xf]
        %v888 = vld [vmem:[#allocation8 + $0x2c] sm:$0xf]
        %v889 = vld [vmem:[#allocation8 + $0x30] sm:$0xf]
        %v890 = vld [vmem:[#allocation8 + $0x34] sm:$0xf]
        %v891 = vld [vmem:[#allocation8 + $0x38] sm:$0xf]
        %v892 = vld [vmem:[#allocation8 + $0x3c] sm:$0xf]
        %v893 = vld [vmem:[%s6] sm:$0x1]
        %v894 = vld [vmem:[#allocation10] sm:$0xf]
        %v895 = vld [vmem:[#allocation10 + $0x4] sm:$0xf]
        %v896 = vld [vmem:[#allocation10 + $0x8] sm:$0xf]
        %v897 = vld [vmem:[#allocation10 + $0xc] sm:$0xf]
        %v898 = vld [vmem:[#allocation10 + $0x10] sm:$0xf]
        %v899 = vld [vmem:[#allocation10 + $0x14] sm:$0xf]
        %v900 = vld [vmem:[#allocation10 + $0x18] sm:$0xf]
        %v901 = vld [vmem:[#allocation10 + $0x1c] sm:$0xf]
        %v902 = vld [vmem:[#allocation10 + $0x20] sm:$0xf]
        %v903 = vld [vmem:[#allocation10 + $0x24] sm:$0xf]
        %v904 = vld [vmem:[#allocation10 + $0x28] sm:$0xf]
        %v905 = vld [vmem:[#allocation10 + $0x2c] sm:$0xf]
        %v906 = vld [vmem:[#allocation10 + $0x30] sm:$0xf]
        %v907 = vld [vmem:[#allocation10 + $0x34] sm:$0xf]
        %v908 = vld [vmem:[#allocation10 + $0x38] sm:$0xf]
        %v909 = vld [vmem:[#allocation10 + $0x3c] sm:$0xf]
        %v910 = vld [vmem:[%s8] sm:$0x1]
        %v911 = vld [vmem:[#allocation11] sm:$0xf]
        %v912 = vld [vmem:[#allocation11 + $0x4] sm:$0xf]
        %v913 = vld [vmem:[#allocation11 + $0x8] sm:$0xf]
        %v914 = vld [vmem:[#allocation11 + $0xc] sm:$0xf]
        %v915 = vld [vmem:[#allocation11 + $0x10] sm:$0xf]
        %v916 = vld [vmem:[#allocation11 + $0x14] sm:$0xf]
        %v917 = vld [vmem:[#allocation11 + $0x18] sm:$0xf]
        %v918 = vld [vmem:[#allocation11 + $0x1c] sm:$0xf]
        %v919 = vld [vmem:[#allocation11 + $0x20] sm:$0xf]
        %v920 = vld [vmem:[#allocation11 + $0x24] sm:$0xf]
        %v921 = vld [vmem:[#allocation11 + $0x28] sm:$0xf]
        %v922 = vld [vmem:[#allocation11 + $0x2c] sm:$0xf]
        %v923 = vld [vmem:[#allocation11 + $0x30] sm:$0xf]
        %v924 = vld [vmem:[#allocation11 + $0x34] sm:$0xf]
        %v925 = vld [vmem:[#allocation11 + $0x38] sm:$0xf]
        %v926 = vld [vmem:[#allocation11 + $0x3c] sm:$0xf]
        %v927 = vld [vmem:[%s678] sm:$0x1]
        %v928 = vld [vmem:[%s11] sm:$0x1]
        %v929 = vld [vmem:[#allocation13] sm:$0xff]
        %v930 = vld [vmem:[#allocation13 + $0x8] sm:$0xff]
        %v931 = vld [vmem:[#allocation13 + $0x10] sm:$0xff]
        %v932 = vld [vmem:[#allocation13 + $0x18] sm:$0xff]
        %v933 = vld [vmem:[#allocation13 + $0x20] sm:$0xff]
        %v934 = vld [vmem:[#allocation13 + $0x28] sm:$0xff]
        %v935 = vld [vmem:[#allocation13 + $0x30] sm:$0xff]
        %v936 = vld [vmem:[#allocation13 + $0x38] sm:$0xff]
        %v937 = vld [vmem:[#allocation13 + $0x40] sm:$0xff]
        %v938 = vld [vmem:[#allocation13 + $0x48] sm:$0xff]
        %v939 = vld [vmem:[#allocation13 + $0x50] sm:$0xff]
        %v940 = vld [vmem:[#allocation13 + $0x58] sm:$0xff]
        %v941 = vld [vmem:[#allocation13 + $0x60] sm:$0xff]
        %v942 = vld [vmem:[#allocation13 + $0x68] sm:$0xff]
        %v943 = vld [vmem:[#allocation13 + $0x70] sm:$0xff]
        %v944 = vld [vmem:[#allocation13 + $0x78] sm:$0xff]
        %v945 = vld [vmem:[%s13] sm:$0x3]
        %v946 = vunpack.c.l.bf16 %v875
        %v947 = vlaneseq
        %v948 = vshrl.u32 %v947, 7
        %v949 = vsub.s32 0, %v948
        %v950 = vrot.slane %v946, %v949
        %v951 = vadd.f32 %v874, %v950
        %v953 = vlaneseq
        %v954 = vshrl.u32 %v953, 7
        %v955 = vsub.s32 0, %v954
        %v956 = vrot.slane %v876, %v955
        %v958 = vadd.f32 %v951, %v956
        %v959 = vmax.f32 %v958, 0.0
        %v960 = vpack.c.bf16 %v959, %v959
        %v962 = vlaneseq
        %v963 = vshrl.u32 %v962, 7
        %v964 = vsub.s32 0, %v963
        %v965 = vrot.slane %v893, %v964
        %v983 = vunpack.c.l.b16 %v877
        %v984 = vunpack.c.l.b16 %v878
        %v985 = vunpack.c.l.b16 %v879
        %v986 = vunpack.c.l.b16 %v880
        %v987 = vunpack.c.l.b16 %v881
        %v988 = vunpack.c.l.b16 %v882
        %v989 = vunpack.c.l.b16 %v883
        %v990 = vunpack.c.l.b16 %v884
        %v991 = vunpack.c.l.b16 %v885
        %v992 = vunpack.c.l.b16 %v886
        %v993 = vunpack.c.l.b16 %v887
        %v994 = vunpack.c.l.b16 %v888
        %v995 = vunpack.c.l.b16 %v889
        %v996 = vunpack.c.l.b16 %v890
        %v997 = vunpack.c.l.b16 %v891
        %v998 = vunpack.c.l.b16 %v892
        %v999 = vpack.c.b16 %v984, %v983
        %v1000 = vpack.c.b16 %v986, %v985
        %v1001 = vpack.c.b16 %v988, %v987
        %v1002 = vpack.c.b16 %v990, %v989
        %v1003 = vpack.c.b16 %v992, %v991
        %v1004 = vpack.c.b16 %v994, %v993
        %v1005 = vpack.c.b16 %v996, %v995
        %v1006 = vpack.c.b16 %v998, %v997
        %1015 = vmatprep.subr.bf16.mxu0 0
        %1016 = vmatpush1.bf16.msra.mxu0 %v1006
        %1017 = vmatprep.subr.bf16.mxu0 0
        %1018 = vmatpush1.bf16.msra.mxu0 %v1005
        %1019 = vmatprep.subr.bf16.mxu0 0
        %1020 = vmatpush1.bf16.msra.mxu0 %v1004
        %1021 = vmatprep.subr.bf16.mxu0 0
        %1022 = vmatpush1.bf16.msra.mxu0 %v1003
        %1023 = vmatprep.subr.bf16.mxu0 0
        %1024 = vmatpush1.bf16.msra.mxu0 %v1002
        %1025 = vmatprep.subr.bf16.mxu0 0
        %1026 = vmatpush1.bf16.msra.mxu0 %v1001
        %1027 = vmatprep.subr.bf16.mxu0 0
        %1028 = vmatpush1.bf16.msra.mxu0 %v1000
        %1029 = vmatprep.subr.bf16.mxu0 0
        %1030 = vmatpush1.bf16.msra.mxu0 %v999
        %1031 = vmatprep.subr.bf16.mxu0 0
        %1032 = vmatpush2.bf16.msra.mxu0 0
        %1033 = vmatprep.subr.bf16.mxu0 0
        %1034 = vmatpush2.bf16.msra.mxu0 0
        %1035 = vmatprep.subr.bf16.mxu0 0
        %1036 = vmatpush2.bf16.msra.mxu0 0
        %1037 = vmatprep.subr.bf16.mxu0 0
        %1038 = vmatpush2.bf16.msra.mxu0 0
        %1039 = vmatprep.subr.bf16.mxu0 0
        %1040 = vmatpush2.bf16.msra.mxu0 0
        %1041 = vmatprep.subr.bf16.mxu0 0
        %1042 = vmatpush2.bf16.msra.mxu0 0
        %1043 = vmatprep.subr.bf16.mxu0 0
        %1044 = vmatpush2.bf16.msra.mxu0 0
        %1045 = vmatprep.subr.bf16.mxu0 0
        %1046 = vmatpush2.bf16.msra.mxu0 0
        %1047 = vmatprep.mubr.bf16.mxu0 0
        %1048 = vmatmul.mubr.bf16.gmra.mxu0 %v960
        %v1049 = vpop.f32.mrf.mxu0
        %v1050 = vadd.f32 %v965, %v1049
        %v1051 = vpop.f32.mrf.mxu0
        %v1052 = vpop.f32.mrf.mxu0
        %v1053 = vpop.f32.mrf.mxu0
        %1054 = vdwg.mxu0
        %v1056 = vlaneseq
        %v1057 = vshrl.u32 %v1056, 7
        %v1058 = vsub.s32 0, %v1057
        %v1059 = vrot.slane %v910, %v1058
        %v1077 = vunpack.c.l.b16 %v894
        %v1078 = vunpack.c.l.b16 %v895
        %v1079 = vunpack.c.l.b16 %v896
        %v1080 = vunpack.c.l.b16 %v897
        %v1081 = vunpack.c.l.b16 %v898
        %v1082 = vunpack.c.l.b16 %v899
        %v1083 = vunpack.c.l.b16 %v900
        %v1084 = vunpack.c.l.b16 %v901
        %v1085 = vunpack.c.l.b16 %v902
        %v1086 = vunpack.c.l.b16 %v903
        %v1087 = vunpack.c.l.b16 %v904
        %v1088 = vunpack.c.l.b16 %v905
        %v1089 = vunpack.c.l.b16 %v906
        %v1090 = vunpack.c.l.b16 %v907
        %v1091 = vunpack.c.l.b16 %v908
        %v1092 = vunpack.c.l.b16 %v909
        %v1093 = vpack.c.b16 %v1078, %v1077
        %v1094 = vpack.c.b16 %v1080, %v1079
        %v1095 = vpack.c.b16 %v1082, %v1081
        %v1096 = vpack.c.b16 %v1084, %v1083
        %v1097 = vpack.c.b16 %v1086, %v1085
        %v1098 = vpack.c.b16 %v1088, %v1087
        %v1099 = vpack.c.b16 %v1090, %v1089
        %v1100 = vpack.c.b16 %v1092, %v1091
        %1109 = vmatprep.subr.bf16.mxu0 0
        %1110 = vmatpush1.bf16.msra.mxu0 %v1100
        %1111 = vmatprep.subr.bf16.mxu0 0
        %1112 = vmatpush1.bf16.msra.mxu0 %v1099
        %1113 = vmatprep.subr.bf16.mxu0 0
        %1114 = vmatpush1.bf16.msra.mxu0 %v1098
        %1115 = vmatprep.subr.bf16.mxu0 0
        %1116 = vmatpush1.bf16.msra.mxu0 %v1097
        %1117 = vmatprep.subr.bf16.mxu0 0
        %1118 = vmatpush1.bf16.msra.mxu0 %v1096
        %1119 = vmatprep.subr.bf16.mxu0 0
        %1120 = vmatpush1.bf16.msra.mxu0 %v1095
        %1121 = vmatprep.subr.bf16.mxu0 0
        %1122 = vmatpush1.bf16.msra.mxu0 %v1094
        %1123 = vmatprep.subr.bf16.mxu0 0
        %1124 = vmatpush1.bf16.msra.mxu0 %v1093
        %1125 = vmatprep.subr.bf16.mxu0 0
        %1126 = vmatpush2.bf16.msra.mxu0 0
        %1127 = vmatprep.subr.bf16.mxu0 0
        %1128 = vmatpush2.bf16.msra.mxu0 0
        %1129 = vmatprep.subr.bf16.mxu0 0
        %1130 = vmatpush2.bf16.msra.mxu0 0
        %1131 = vmatprep.subr.bf16.mxu0 0
        %1132 = vmatpush2.bf16.msra.mxu0 0
        %1133 = vmatprep.subr.bf16.mxu0 0
        %1134 = vmatpush2.bf16.msra.mxu0 0
        %1135 = vmatprep.subr.bf16.mxu0 0
        %1136 = vmatpush2.bf16.msra.mxu0 0
        %1137 = vmatprep.subr.bf16.mxu0 0
        %1138 = vmatpush2.bf16.msra.mxu0 0
        %1139 = vmatprep.subr.bf16.mxu0 0
        %1140 = vmatpush2.bf16.msra.mxu0 0
        %1141 = vmatprep.mubr.bf16.mxu0 0
        %1142 = vmatmul.mubr.bf16.gmra.mxu0 %v960
        %v1143 = vpop.f32.mrf.mxu0
        %v1144 = vadd.f32 %v1059, %v1143
        %v1145 = vpop.f32.mrf.mxu0
        %v1146 = vpop.f32.mrf.mxu0
        %v1147 = vpop.f32.mrf.mxu0
        %1148 = vdwg.mxu0
        %v1149 = vmul.f32 %v1144, 0.5
        %v1150 = vmul.f32 %v1149, 1.442695
        %v1151 = vpow.pop %v1150
        %v1152 = vmul.f32 %v1151, %v873
        %v1153 = vadd.f32 %v1050, %v1152
        %v1154 = vpack.c.bf16 %v1153, %v1153
        %v1155 = vunpack.c.l.bf16 %v927
        %v1156 = vlaneseq
        %v1157 = vshrl.u32 %v1156, 7
        %v1158 = vsub.s32 0, %v1157
        %v1159 = vrot.slane %v1155, %v1158
        %v1176 = vunpack.c.l.b16 %v911
        %v1177 = vunpack.c.l.b16 %v912
        %v1178 = vunpack.c.l.b16 %v913
        %v1179 = vunpack.c.l.b16 %v914
        %v1180 = vunpack.c.l.b16 %v915
        %v1181 = vunpack.c.l.b16 %v916
        %v1182 = vunpack.c.l.b16 %v917
        %v1183 = vunpack.c.l.b16 %v918
        %v1184 = vunpack.c.l.b16 %v919
        %v1185 = vunpack.c.l.b16 %v920
        %v1186 = vunpack.c.l.b16 %v921
        %v1187 = vunpack.c.l.b16 %v922
        %v1188 = vunpack.c.l.b16 %v923
        %v1189 = vunpack.c.l.b16 %v924
        %v1190 = vunpack.c.l.b16 %v925
        %v1191 = vunpack.c.l.b16 %v926
        %v1192 = vpack.c.b16 %v1177, %v1176
        %v1193 = vpack.c.b16 %v1179, %v1178
        %v1194 = vpack.c.b16 %v1181, %v1180
        %v1195 = vpack.c.b16 %v1183, %v1182
        %v1196 = vpack.c.b16 %v1185, %v1184
        %v1197 = vpack.c.b16 %v1187, %v1186
        %v1198 = vpack.c.b16 %v1189, %v1188
        %v1199 = vpack.c.b16 %v1191, %v1190
        %1208 = vmatprep.subr.bf16.mxu0 0
        %1209 = vmatpush1.bf16.msra.mxu0 %v1199
        %1210 = vmatprep.subr.bf16.mxu0 0
        %1211 = vmatpush1.bf16.msra.mxu0 %v1198
        %1212 = vmatprep.subr.bf16.mxu0 0
        %1213 = vmatpush1.bf16.msra.mxu0 %v1197
        %1214 = vmatprep.subr.bf16.mxu0 0
        %1215 = vmatpush1.bf16.msra.mxu0 %v1196
        %1216 = vmatprep.subr.bf16.mxu0 0
        %1217 = vmatpush1.bf16.msra.mxu0 %v1195
        %1218 = vmatprep.subr.bf16.mxu0 0
        %1219 = vmatpush1.bf16.msra.mxu0 %v1194
        %1220 = vmatprep.subr.bf16.mxu0 0
        %1221 = vmatpush1.bf16.msra.mxu0 %v1193
        %1222 = vmatprep.subr.bf16.mxu0 0
        %1223 = vmatpush1.bf16.msra.mxu0 %v1192
        %1224 = vmatprep.subr.bf16.mxu0 0
        %1225 = vmatpush2.bf16.msra.mxu0 0
        %1226 = vmatprep.subr.bf16.mxu0 0
        %1227 = vmatpush2.bf16.msra.mxu0 0
        %1228 = vmatprep.subr.bf16.mxu0 0
        %1229 = vmatpush2.bf16.msra.mxu0 0
        %1230 = vmatprep.subr.bf16.mxu0 0
        %1231 = vmatpush2.bf16.msra.mxu0 0
        %1232 = vmatprep.subr.bf16.mxu0 0
        %1233 = vmatpush2.bf16.msra.mxu0 0
        %1234 = vmatprep.subr.bf16.mxu0 0
        %1235 = vmatpush2.bf16.msra.mxu0 0
        %1236 = vmatprep.subr.bf16.mxu0 0
        %1237 = vmatpush2.bf16.msra.mxu0 0
        %1238 = vmatprep.subr.bf16.mxu0 0
        %1239 = vmatpush2.bf16.msra.mxu0 0
        %1240 = vmatprep.mubr.bf16.mxu0 0
        %1241 = vmatmul.mubr.bf16.gmra.mxu0 %v1154
        %v1242 = vpop.f32.mrf.mxu0
        %v1243 = vadd.f32 %v1159, %v1242
        %v1244 = vpop.f32.mrf.mxu0
        %v1245 = vpop.f32.mrf.mxu0
        %v1246 = vpop.f32.mrf.mxu0
        %1247 = vdwg.mxu0
        %v1249 = vlaneseq
        %v1250 = vshrl.u32 %v1249, 7
        %v1251 = vsub.s32 0, %v1250
        %v1252 = vrot.slane %v928, %v1251
        %v1254 = vadd.f32 %v1243, %v1252
        %v1255 = vmax.f32 %v1254, 0.0
        %v1256 = vpack.c.bf16 %v1255, %v1255
        %v1258 = vlaneseq
        %v1259 = vshrl.u32 %v1258, 7
        %v1260 = vsub.s32 0, %v1259
        %v1261 = vrot.slane %v945, %v1260
        %v1262 = vlaneseq
        %v1263 = vshrl.u32 %v1262, 7
        %v1264 = vsub.s32 1, %v1263
        %v1265 = vrot.slane %v945, %v1264
        %v1284 = vunpack.c.l.b16 %v929
        %v1285 = vunpack.c.h.b16 %v929
        %v1286 = vunpack.c.l.b16 %v930
        %v1287 = vunpack.c.h.b16 %v930
        %v1288 = vunpack.c.l.b16 %v931
        %v1289 = vunpack.c.h.b16 %v931
        %v1290 = vunpack.c.l.b16 %v932
        %v1291 = vunpack.c.h.b16 %v932
        %v1292 = vunpack.c.l.b16 %v933
        %v1293 = vunpack.c.h.b16 %v933
        %v1294 = vunpack.c.l.b16 %v934
        %v1295 = vunpack.c.h.b16 %v934
        %v1296 = vunpack.c.l.b16 %v935
        %v1297 = vunpack.c.h.b16 %v935
        %v1298 = vunpack.c.l.b16 %v936
        %v1299 = vunpack.c.h.b16 %v936
        %v1300 = vunpack.c.l.b16 %v937
        %v1301 = vunpack.c.h.b16 %v937
        %v1302 = vunpack.c.l.b16 %v938
        %v1303 = vunpack.c.h.b16 %v938
        %v1304 = vunpack.c.l.b16 %v939
        %v1305 = vunpack.c.h.b16 %v939
        %v1306 = vunpack.c.l.b16 %v940
        %v1307 = vunpack.c.h.b16 %v940
        %v1308 = vunpack.c.l.b16 %v941
        %v1309 = vunpack.c.h.b16 %v941
        %v1310 = vunpack.c.l.b16 %v942
        %v1311 = vunpack.c.h.b16 %v942
        %v1312 = vunpack.c.l.b16 %v943
        %v1313 = vunpack.c.h.b16 %v943
        %v1314 = vunpack.c.l.b16 %v944
        %v1315 = vunpack.c.h.b16 %v944
        %v1316 = vpack.c.b16 %v1286, %v1284
        %v1317 = vpack.c.b16 %v1287, %v1285
        %v1318 = vpack.c.b16 %v1290, %v1288
        %v1319 = vpack.c.b16 %v1291, %v1289
        %v1320 = vpack.c.b16 %v1294, %v1292
        %v1321 = vpack.c.b16 %v1295, %v1293
        %v1322 = vpack.c.b16 %v1298, %v1296
        %v1323 = vpack.c.b16 %v1299, %v1297
        %v1324 = vpack.c.b16 %v1302, %v1300
        %v1325 = vpack.c.b16 %v1303, %v1301
        %v1326 = vpack.c.b16 %v1306, %v1304
        %v1327 = vpack.c.b16 %v1307, %v1305
        %v1328 = vpack.c.b16 %v1310, %v1308
        %v1329 = vpack.c.b16 %v1311, %v1309
        %v1330 = vpack.c.b16 %v1314, %v1312
        %v1331 = vpack.c.b16 %v1315, %v1313
        %1348 = vmatprep.subr.bf16.mxu0 %v1331
        %1349 = vmatpush1.bf16.msra.mxu0 %v1330
        %1350 = vmatprep.subr.bf16.mxu0 %v1329
        %1351 = vmatpush1.bf16.msra.mxu0 %v1328
        %1352 = vmatprep.subr.bf16.mxu0 %v1327
        %1353 = vmatpush1.bf16.msra.mxu0 %v1326
        %1354 = vmatprep.subr.bf16.mxu0 %v1325
        %1355 = vmatpush1.bf16.msra.mxu0 %v1324
        %1356 = vmatprep.subr.bf16.mxu0 %v1323
        %1357 = vmatpush1.bf16.msra.mxu0 %v1322
        %1358 = vmatprep.subr.bf16.mxu0 %v1321
        %1359 = vmatpush1.bf16.msra.mxu0 %v1320
        %1360 = vmatprep.subr.bf16.mxu0 %v1319
        %1361 = vmatpush1.bf16.msra.mxu0 %v1318
        %1362 = vmatprep.subr.bf16.mxu0 %v1317
        %1363 = vmatpush1.bf16.msra.mxu0 %v1316
        %1364 = vmatprep.subr.bf16.mxu0 0
        %1365 = vmatpush2.bf16.msra.mxu0 0
        %1366 = vmatprep.subr.bf16.mxu0 0
        %1367 = vmatpush2.bf16.msra.mxu0 0
        %1368 = vmatprep.subr.bf16.mxu0 0
        %1369 = vmatpush2.bf16.msra.mxu0 0
        %1370 = vmatprep.subr.bf16.mxu0 0
        %1371 = vmatpush2.bf16.msra.mxu0 0
        %1372 = vmatprep.subr.bf16.mxu0 0
        %1373 = vmatpush2.bf16.msra.mxu0 0
        %1374 = vmatprep.subr.bf16.mxu0 0
        %1375 = vmatpush2.bf16.msra.mxu0 0
        %1376 = vmatprep.subr.bf16.mxu0 0
        %1377 = vmatpush2.bf16.msra.mxu0 0
        %1378 = vmatprep.subr.bf16.mxu0 0
        %1379 = vmatpush2.bf16.msra.mxu0 0
        %1380 = vmatprep.mubr.bf16.mxu0 0
        %1381 = vmatmul.mubr.bf16.gmra.mxu0 %v1256
        %v1382 = vpop.f32.mrf.mxu0
        %v1383 = vadd.f32 %v1261, %v1382
        %v1384 = vpop.f32.mrf.mxu0
        %v1385 = vadd.f32 %v1265, %v1384
        %v1386 = vpop.f32.mrf.mxu0
        %v1387 = vpop.f32.mrf.mxu0
        %1388 = vdwg.mxu0
        %v1389 = vxor.u32 %v1383, 2147483648
        %v1390 = vxor.u32 %v1385, 2147483648
        %v1391 = vmul.f32 %v1389, 1.442695
        %v1392 = vpow.pop %v1391
        %v1393 = vmul.f32 %v1390, 1.442695
        %v1394 = vpow.pop %v1393
        %v1395 = vadd.f32 %v1392, 1.0
        %v1396 = vadd.f32 %v1394, 1.0
        %v1397 = vrcp.pop %v1395
        %v1398 = vmul.f32 1.0, %v1397
        %v1399 = vrcp.pop %v1396
        %v1400 = vmul.f32 1.0, %v1399
        %v1401 = vlog2.pop %v1398
        %v1402 = vmul.f32 %v1401, 0.6931472
        %v1403 = vlog2.pop %v1400
        %v1404 = vmul.f32 %v1403, 0.6931472
        %v1405 = vmax.f32 %v1402, -100.0
        %v1406 = vmax.f32 %v1404, -100.0
        %v1407 = vsub.f32 1.0, %v1398
        %v1408 = vsub.f32 1.0, %v1400
        %v1409 = vlog2.pop %v1407
        %v1410 = vmul.f32 %v1409, 0.6931472
        %v1411 = vlog2.pop %v1408
        %v1412 = vmul.f32 %v1411, 0.6931472
        %v1413 = vmax.f32 %v1410, -100.0
        %v1414 = vmax.f32 %v1412, -100.0
        %v1415 = vmul.f32 %v696, %v1405
        %v1416 = vmul.f32 %v697, %v1406
        %v1417 = vsub.f32 1.0, %v696
        %v1418 = vsub.f32 1.0, %v697
        %v1419 = vmul.f32 %v1417, %v1413
        %v1420 = vmul.f32 %v1418, %v1414
        %v1421 = vadd.f32 %v1415, %v1419
        %v1422 = vadd.f32 %v1416, %v1420
        %v1423 = vadd.f32 %v1421, %v1422
        %1424 = vadd.xlane.f32.xlu0 %v1423
        %v1425 = vpop.xlane.xlu0 %1424
        %v1426 = vsub.f32 0.0, %v1425
        %v1427 = vadd.f32 %v1144, 1.0
        %v1428 = vmul.f32 %v1050, %v1050
        %v1429 = vsub.f32 %v1427, %v1428
        %v1430 = vmul.f32 %v1151, %v1151
        %v1431 = vsub.f32 %v1429, %v1430
        %1432 = vadd.xlane.f32.xlu0 %v1431
        %v1433 = vpop.xlane.xlu0 %1432
        %v1434 = vmul.f32 %v1433, -0.5
        %vm1435 = vcmask 7168
        %1436 = vst.msk [vmem:[%s686] sm:$0xff] %vm1435, %v1426
        %1437 = vst.msk [vmem:[%s694] sm:$0xff] %vm1435, %v1434
        %p1438 = scmp.lt.s32.totalorder %s40, 3
        %s1439 = scalar_select %p1438, %s40, 3
        %p1440 = scmp.lt.s32.totalorder %s39, 1
        %s1441 = scalar_select %p1440, %s39, 1
        %s1442 = smul.addr %s1439, 2
        %s1443 = sadd.s32 %s1441, %s1442
        %s1444 = smul.addr %s1443, 8
        %s1445 = scalar_lea.vmem %s14, %s1444
        %p1446 = scmp.lt.s32.totalorder %s40, 3
        %s1447 = scalar_select %p1446, %s40, 3
        %p1448 = scmp.lt.s32.totalorder %s39, 1
        %s1449 = scalar_select %p1448, %s39, 1
        %s1450 = smul.addr %s1447, 2
        %s1451 = sadd.s32 %s1449, %s1450
        %s1452 = smul.addr %s1451, 8
        %s1453 = scalar_lea.vmem %s15, %s1452
        // Predicated region
        $region109: #{tpu_custom_call.1} parent=75 // pred_check
          %p1454 = pneg %p383
        $region110: #{tpu_custom_call.1} parent=75 // pred_check_branch
          %1456 = sbr.rel (%p1454) target = $region112
        $region111: #{tpu_custom_call.1} parent=75 // pred_region
          _
        $region112: #{tpu_custom_call.1} parent=75 // pred_fallthru
          _
        // Predicated region
        $region113: #{tpu_custom_call.1} parent=75 // pred_check
          %p1457 = pneg %p411
        $region114: #{tpu_custom_call.1} parent=75 // pred_check_branch
          %1459 = sbr.rel (%p1457) target = $region116
        $region115: #{tpu_custom_call.1} parent=75 // pred_region
          _
        $region116: #{tpu_custom_call.1} parent=75 // pred_fallthru
          _
      $region76: #{tpu_custom_call.1} parent=5 // pred_fallthru
        _
      %p1460 = scmp.le.s32.totalorder 2, %s30
      // Predicated region
      $region117: #{tpu_custom_call.1} parent=5 // pred_check
        %p1461 = pneg %p1460
      $region118: #{tpu_custom_call.1} parent=5 // pred_check_branch
        %1463 = sbr.rel (%p1461) target = $region120
      $region119: #{tpu_custom_call.1} parent=5 // pred_region
        %s1464 = ssub.s32 %s30, 2
        // Predicated region
        $region121: #{tpu_custom_call.1} parent=119 // pred_check
          %p1465 = pneg %p389
        $region122: #{tpu_custom_call.1} parent=119 // pred_check_branch
          %1467 = sbr.rel (%p1465) target = $region124
        $region123: #{tpu_custom_call.1} parent=119 // pred_region
          %p1468 = scmp.lt.s32.totalorder %s42, 3
          %s1469 = scalar_select %p1468, %s42, 3
          %p1470 = scmp.lt.s32.totalorder %s41, 1
          %s1471 = scalar_select %p1470, %s41, 1
          %s1472 = smul.addr %s1469, 2
          %s1473 = sadd.s32 %s1471, %s1472
          %s1474 = smul.addr %s1473, 8
          %s1475 = scalar_lea.vmem %s14, %s1474
        $region124: #{tpu_custom_call.1} parent=119 // pred_fallthru
          _
        // Predicated region
        $region125: #{tpu_custom_call.1} parent=119 // pred_check
          %p1476 = pneg %p417
        $region126: #{tpu_custom_call.1} parent=119 // pred_check_branch
          %1478 = sbr.rel (%p1476) target = $region128
        $region127: #{tpu_custom_call.1} parent=119 // pred_region
          %p1479 = scmp.lt.s32.totalorder %s42, 3
          %s1480 = scalar_select %p1479, %s42, 3
          %p1481 = scmp.lt.s32.totalorder %s41, 1
          %s1482 = scalar_select %p1481, %s41, 1
          %s1483 = smul.addr %s1480, 2
          %s1484 = sadd.s32 %s1482, %s1483
          %s1485 = smul.addr %s1484, 8
          %s1486 = scalar_lea.vmem %s15, %s1485
        $region128: #{tpu_custom_call.1} parent=119 // pred_fallthru
          _
      $region120: #{tpu_custom_call.1} parent=5 // pred_fallthru
        _
    $region6: #{tpu_custom_call.1} parent=1 // loop_footer
      %s34 = sadd.s32 1, %s30
    $region7: #{tpu_custom_call.1} parent=1 // loop_footer_branch
      %29 = sbr.rel target = $region3
    $region8: #{tpu_custom_call.1} parent=1 // loop_exit
      _
    %1487 = vsyncpa [#allocation4], 1
    %s1488 = scalar_lea.sflag [#allocation4], 1
    %1489 = vsyncpa %s1488, 1
    %1490 = vsyncpa [#allocation6], 1
    %s1491 = scalar_lea.sflag [#allocation6], 1
    %1492 = vsyncpa %s1491, 1
    %1493 = vsyncpa [#allocation9], 1
    %1494 = vsyncpa [#allocation12], 1

</llo_original>
